<compile_context>
chip_gen: v7x
topology: tpu7x:2x2x1
jax: 0.10.0
libtpu: 0.0.40
codegen_flags: <defaults>
</compile_context>

<pallas_src>
import functools

import jax
import jax.numpy as jnp
import numpy as np
from jax.experimental import pallas as pl
from jax.experimental.pallas import tpu as pltpu


# ---------------------------------------------------------------------------
# numerics helpers (identical in kernel and reference so results match)
# ---------------------------------------------------------------------------
def _sigmoid(x):
    return 1.0 / (1.0 + jnp.exp(-x))


def _softplus(x):
    return jnp.where(x > 20.0, x, jnp.log(1.0 + jnp.exp(jnp.minimum(x, 20.0))))


# ---------------------------------------------------------------------------
# fused Pallas kernel: Mamba block + Flatten + Linear for one batch block
# ---------------------------------------------------------------------------
def mambas_fused_kernel(x_ref, win_ref, wconv_ref, bconv_ref, wx_ref, wdt_ref,
                        bdt_ref, a_ref, dparam_ref, wout_ref, wfc_ref, bfc_ref,
                        o_ref, y_sc, flat_sc,
                        *, Bb, L, d_model, d_inner, d_state, d_conv, dt_rank):
    f32 = jnp.float32
    dm, di, st, K, dtr = d_model, d_inner, d_state, d_conv, dt_rank

    # ---- in_proj over ALL (batch, time) rows at once: (Bb*L, dm) @ (dm, 2di)
    x2 = x_ref[...].astype(f32).reshape(Bb * L, dm)
    xz = jnp.dot(x2, win_ref[...], preferred_element_type=f32)    # (Bb*L, 2di)
    x_in = xz[:, :di]                                             # conv/SSM path
    z = xz[:, di:]                                                # gate path

    # ---- causal depthwise conv1d (padding = K-1, keep first L outputs) + SiLU
    x_in3 = x_in.reshape(Bb, L, di)
    xpad = jnp.concatenate(
        [jnp.zeros((Bb, K - 1, di), f32), x_in3], axis=1)         # (Bb, L+K-1, di)
    conv = jnp.broadcast_to(bconv_ref[...], (Bb, L, di))
    for j in range(K):
        conv = conv + xpad[:, j:j + L, :] * wconv_ref[j:j + 1, :]
    x_act3 = conv * _sigmoid(conv)                                # (Bb, L, di)
    x_act2 = x_act3.reshape(Bb * L, di)

    # ---- x_proj -> (dt, B, C), again over all rows at once
    xdbl = jnp.dot(x_act2, wx_ref[...], preferred_element_type=f32)
    dt_in = xdbl[:, :dtr]                                         # (Bb*L, dtr)
    if dtr == 1:
        # K=1 contraction: do it on the VPU as a broadcast outer product
        dt2 = dt_in * wdt_ref[...]                                # (Bb*L, di)
    else:
        dt2 = jnp.dot(dt_in, wdt_ref[...], preferred_element_type=f32)
    dt2 = _softplus(dt2 + bdt_ref[...])                           # (Bb*L, di)
    dt3 = dt2.reshape(Bb, L, di)

    # ---- hoisted out of the scan: one small transpose of B/C (st -> sublanes)
    B_T3 = jnp.swapaxes(xdbl[:, dtr:dtr + st].reshape(Bb, L, st), 1, 2)  # (Bb,st,L)
    C_T3 = jnp.swapaxes(xdbl[:, dtr + st:].reshape(Bb, L, st), 1, 2)     # (Bb,st,L)

    # ---- hoisted out of the scan: one big EUP exp + dt*x product
    dA_all = jnp.exp(dt3[:, :, None, :] * a_ref[...][None, None, :, :])  # (Bb,L,st,di)
    dtx3 = dt3 * x_act3                                                  # (Bb,L,di)

    # ---- selective scan (recurrence over L; L is small & static -> unrolled)
    # h kept as (Bb, d_state, d_inner): state on sublanes, channels on lanes.
    # TODO(synk): for production L (>=1K) switch to lax.fori_loop with dynamic
    # slices and tile the L axis of the matmul phases (v7x 64 MiB VMEM budget).
    h = jnp.zeros((Bb, st, di), f32)
    for t in range(L):
        b_col = B_T3[:, :, t:t + 1]                               # (Bb, st, 1)
        c_col = C_T3[:, :, t:t + 1]                               # (Bb, st, 1)
        h = dA_all[:, t] * h + dtx3[:, t:t + 1, :] * b_col        # (Bb, st, di)
        y_sc[:, t:t + 1, :] = jnp.sum(h * c_col, axis=1, keepdims=True)

    # D skip-connection applied in one shot, then gate with SiLU(z)
    y3 = y_sc[...] + dparam_ref[...] * x_act3                     # (Bb, L, di)
    y2 = y3.reshape(Bb * L, di) * (z * _sigmoid(z))

    # ---- out_proj, Flatten(start_dim=1) assembled lane-dense in VMEM scratch,
    #      then the fused fc layer (no second pallas_call / HBM round trip)
    out3 = jnp.dot(y2, wout_ref[...],
                   preferred_element_type=f32).reshape(Bb, L, dm)  # (Bb, L, dm)
    for l in range(L):
        flat_sc[:, l * dm:(l + 1) * dm] = out3[:, l, :]
    fc = jnp.dot(flat_sc[...], wfc_ref[...],
                 preferred_element_type=f32) + bfc_ref[...]        # (Bb, out_dim)
    o_ref[...] = fc.astype(o_ref.dtype)


# ---------------------------------------------------------------------------
# wrapper: single pallas_call for the whole module
# ---------------------------------------------------------------------------
def mambas_forward(x, p, *, L, dm, di, st, K, dtr, block_b=None):
    B = x.shape[0]
    out_dim = p["wfc_t"].shape[1]
    if block_b is None:
        # One fused step for small B.  On v7x with large B, pass
        # block_b = B // 2 (a multiple of 8) so both TensorCores get work.
        block_b = B
    assert B % block_b == 0, "batch must be divisible by block_b"

    kern = functools.partial(mambas_fused_kernel, Bb=block_b, L=L, d_model=dm,
                             d_inner=di, d_state=st, d_conv=K, dt_rank=dtr)
    return pl.pallas_call(
        kern,
        out_shape=jax.ShapeDtypeStruct((B, out_dim), x.dtype),
        grid=(B // block_b,),
        in_specs=[
            pl.BlockSpec((block_b, L, dm), lambda b: (b, 0, 0)),   # x
            pl.BlockSpec((dm, 2 * di), lambda b: (0, 0)),          # in_proj.W^T
            pl.BlockSpec((K, di), lambda b: (0, 0)),               # conv weight^T
            pl.BlockSpec((1, di), lambda b: (0, 0)),               # conv bias
            pl.BlockSpec((di, dtr + 2 * st), lambda b: (0, 0)),    # x_proj.W^T
            pl.BlockSpec((dtr, di), lambda b: (0, 0)),             # dt_proj.W^T
            pl.BlockSpec((1, di), lambda b: (0, 0)),               # dt_proj.bias
            pl.BlockSpec((st, di), lambda b: (0, 0)),              # A^T (= -exp(A_log)^T)
            pl.BlockSpec((1, di), lambda b: (0, 0)),               # D
            pl.BlockSpec((di, dm), lambda b: (0, 0)),              # out_proj.W^T
            pl.BlockSpec((L * dm, out_dim), lambda b: (0, 0)),     # fc1.W^T
            pl.BlockSpec((1, out_dim), lambda b: (0, 0)),          # fc1.bias
        ],
        out_specs=pl.BlockSpec((block_b, out_dim), lambda b: (b, 0)),
        scratch_shapes=[
            pltpu.VMEM((block_b, L, di), jnp.float32),       # scan output y
            pltpu.VMEM((block_b, L * dm), jnp.float32),      # flattened mamba out
        ],
        compiler_params=pltpu.CompilerParams(dimension_semantics=("parallel",)),
    )(x, p["win_t"], p["wconv_t"], p["bconv"], p["wx_t"], p["wdt_t"],
      p["bdt"], p["a_t"], p["dparam"], p["wout_t"], p["wfc_t"], p["bfc"])


# ---------------------------------------------------------------------------
# pure-JAX reference (same math, for a correctness check)
# ---------------------------------------------------------------------------
def mambas_reference(x, p, *, L, dm, di, st, K, dtr):
    B = x.shape[0]
    xz = x @ p["win_t"]                                      # (B, L, 2*di)
    x_in, z = xz[..., :di], xz[..., di:]
    xpad = jnp.concatenate([jnp.zeros((B, K - 1, di), x.dtype), x_in], axis=1)
    conv = jnp.broadcast_to(p["bconv"][None], (B, L, di))
    for j in range(K):
        conv = conv + xpad[:, j:j + L, :] * p["wconv_t"][j][None, None, :]
    x_act = conv * _sigmoid(conv)
    xdbl = x_act @ p["wx_t"]
    dt = _softplus(xdbl[..., :dtr] @ p["wdt_t"] + p["bdt"][None])     # (B, L, di)
    B_s = xdbl[..., dtr:dtr + st]
    C_s = xdbl[..., dtr + st:]
    h = jnp.zeros((B, st, di), x.dtype)
    ys = []
    for t in range(L):
        dA = jnp.exp(dt[:, t, :][:, None, :] * p["a_t"][None])        # (B, st, di)
        h = dA * h + (dt[:, t, :] * x_act[:, t, :])[:, None, :] * B_s[:, t, :][:, :, None]
        y_t = jnp.sum(h * C_s[:, t, :][:, :, None], axis=1) + p["dparam"][0] * x_act[:, t, :]
        ys.append(y_t)
    y = jnp.stack(ys, axis=1)                                          # (B, L, di)
    y = y * (z * _sigmoid(z))
    out = y @ p["wout_t"]                                              # (B, L, dm)
    flat = out.reshape(B, L * dm)
    return flat @ p["wfc_t"] + p["bfc"]


# ---------------------------------------------------------------------------
if __name__ == "__main__":
    # small shapes consistent with the module:
    #   model=8, state=4, conv=4, expand=2  ->  d_inner=16, dt_rank=ceil(8/16)=1
    #   k (=seq len) = 8, input_dim = model = 8, out_dim = 16, batch = 2
    dm, st, K, expand = 8, 4, 4, 2
    L, out_dim, B = 8, 16, 2
    di = expand * dm
    dtr = max(1, -(-dm // 16))  # ceil(d_model / 16)

    key = jax.random.PRNGKey(0)
    ks = jax.random.split(key, 10)
    f32 = jnp.float32

    params = {
        "win_t":  0.2 * jax.random.normal(ks[0], (dm, 2 * di), f32),
        "wconv_t": 0.3 * jax.random.normal(ks[1], (K, di), f32),
        "bconv":  0.1 * jax.random.normal(ks[2], (1, di), f32),
        "wx_t":   0.2 * jax.random.normal(ks[3], (di, dtr + 2 * st), f32),
        "wdt_t":  0.5 * jax.random.normal(ks[4], (dtr, di), f32),
        "bdt":    0.1 * jax.random.normal(ks[5], (1, di), f32),
        # A = -exp(A_log) with the standard Mamba init A_log = log([1..d_state]),
        # stored transposed as (d_state, d_inner)
        "a_t":    -jnp.broadcast_to(jnp.arange(1, st + 1, dtype=f32)[:, None], (st, di)),
        "dparam": jnp.ones((1, di), f32),
        "wout_t": 0.2 * jax.random.normal(ks[6], (di, dm), f32),
        "wfc_t":  0.2 * jax.random.normal(ks[7], (L * dm, out_dim), f32),
        "bfc":    0.1 * jax.random.normal(ks[8], (1, out_dim), f32),
    }

    x = jax.random.normal(ks[9], (B, L, dm), f32)

    out = mambas_forward(x, params, L=L, dm=dm, di=di, st=st, K=K, dtr=dtr)
    out = jax.block_until_ready(out)

    ref = mambas_reference(x, params, L=L, dm=dm, di=di, st=st, K=K, dtr=dtr)
    assert out.shape == (B, out_dim)
    assert np.allclose(np.asarray(out), np.asarray(ref), atol=5e-3, rtol=5e-3)

    print("KERNEL_OK")
</pallas_src>

<mosaic_0001>
module attributes {stable_mosaic.version = 11 : i64} {
  func.func @mambas_fused_kernel(%arg0: i32, %arg1: memref<2x8x8xf32, #tpu.memory_space<vmem>>, %arg2: memref<8x32xf32, #tpu.memory_space<vmem>>, %arg3: memref<4x16xf32, #tpu.memory_space<vmem>>, %arg4: memref<1x16xf32, #tpu.memory_space<vmem>>, %arg5: memref<16x9xf32, #tpu.memory_space<vmem>>, %arg6: memref<1x16xf32, #tpu.memory_space<vmem>>, %arg7: memref<1x16xf32, #tpu.memory_space<vmem>>, %arg8: memref<4x16xf32, #tpu.memory_space<vmem>>, %arg9: memref<1x16xf32, #tpu.memory_space<vmem>>, %arg10: memref<16x8xf32, #tpu.memory_space<vmem>>, %arg11: memref<64x16xf32, #tpu.memory_space<vmem>>, %arg12: memref<1x16xf32, #tpu.memory_space<vmem>>, %arg13: memref<2x16xf32, #tpu.memory_space<vmem>>, %arg14: memref<2x8x16xf32, #tpu.memory_space<vmem>>, %arg15: memref<2x64xf32, #tpu.memory_space<vmem>>) attributes {dimension_semantics = [#tpu.dimension_semantics<parallel>], iteration_bounds = array<i64: 1>, scalar_prefetch = 0 : i64, scratch_operands = 2 : i64, tpu.core_type = #tpu.core_type<tc>, window_params = [{transform_indices = @transform_0, window_bounds = array<i64: 2, 8, 8>}, {pipeline_mode = #tpu.pipeline_mode<synchronous>, transform_indices = @transform_1, window_bounds = array<i64: 8, 32>}, {pipeline_mode = #tpu.pipeline_mode<synchronous>, transform_indices = @transform_2, window_bounds = array<i64: 4, 16>}, {pipeline_mode = #tpu.pipeline_mode<synchronous>, transform_indices = @transform_3, window_bounds = array<i64: 1, 16>}, {pipeline_mode = #tpu.pipeline_mode<synchronous>, transform_indices = @transform_4, window_bounds = array<i64: 16, 9>}, {pipeline_mode = #tpu.pipeline_mode<synchronous>, transform_indices = @transform_5, window_bounds = array<i64: 1, 16>}, {pipeline_mode = #tpu.pipeline_mode<synchronous>, transform_indices = @transform_6, window_bounds = array<i64: 1, 16>}, {pipeline_mode = #tpu.pipeline_mode<synchronous>, transform_indices = @transform_7, window_bounds = array<i64: 4, 16>}, {pipeline_mode = #tpu.pipeline_mode<synchronous>, transform_indices = @transform_8, window_bounds = array<i64: 1, 16>}, {pipeline_mode = #tpu.pipeline_mode<synchronous>, transform_indices = @transform_9, window_bounds = array<i64: 16, 8>}, {pipeline_mode = #tpu.pipeline_mode<synchronous>, transform_indices = @transform_10, window_bounds = array<i64: 64, 16>}, {pipeline_mode = #tpu.pipeline_mode<synchronous>, transform_indices = @transform_11, window_bounds = array<i64: 1, 16>}, {transform_indices = @transform_12, window_bounds = array<i64: 2, 16>}]} {
    %c0 = arith.constant 0 : index
    %c0_0 = arith.constant 0 : index
    %c0_1 = arith.constant 0 : index
    %0 = vector.load %arg1[%c0, %c0_0, %c0_1] : memref<2x8x8xf32, #tpu.memory_space<vmem>>, vector<2x8x8xf32>
    %1 = vector.shape_cast %0 : vector<2x8x8xf32> to vector<16x8xf32>
    %c0_2 = arith.constant 0 : index
    %c0_3 = arith.constant 0 : index
    %2 = vector.load %arg2[%c0_2, %c0_3] : memref<8x32xf32, #tpu.memory_space<vmem>>, vector<8x32xf32>
    %cst = arith.constant dense<0.000000e+00> : vector<16x32xf32>
    %3 = tpu.matmul %1, %2, %cst {dimension_numbers = #tpu.dot_dimension_numbers<[1], [0], [0], [1], [0, 0, 1, 1], [], []>} : vector<16x8xf32>, vector<8x32xf32>, vector<16x32xf32> -> vector<16x32xf32>
    %4 = vector.extract_strided_slice %3 {offsets = [0, 0], sizes = [16, 16], strides = [1, 1]} : vector<16x32xf32> to vector<16x16xf32>
    %5 = vector.extract_strided_slice %3 {offsets = [0, 16], sizes = [16, 16], strides = [1, 1]} : vector<16x32xf32> to vector<16x16xf32>
    %6 = vector.shape_cast %4 : vector<16x16xf32> to vector<2x8x16xf32>
    %cst_4 = arith.constant 0.000000e+00 : f32
    %7 = vector.broadcast %cst_4 : f32 to vector<2x3x16xf32>
    %8 = tpu.concatenate %7, %6 in 1 : vector<2x3x16xf32>, vector<2x8x16xf32> -> vector<2x11x16xf32>
    %c0_5 = arith.constant 0 : index
    %c0_6 = arith.constant 0 : index
    %9 = vector.load %arg4[%c0_5, %c0_6] : memref<1x16xf32, #tpu.memory_space<vmem>>, vector<1x16xf32>
    %10 = vector.shape_cast %9 : vector<1x16xf32> to vector<1x1x16xf32>
    %11 = vector.broadcast %10 : vector<1x1x16xf32> to vector<2x8x16xf32>
    %12 = vector.extract_strided_slice %8 {offsets = [0, 0, 0], sizes = [2, 8, 16], strides = [1, 1, 1]} : vector<2x11x16xf32> to vector<2x8x16xf32>
    %c0_7 = arith.constant 0 : index
    %c0_8 = arith.constant 0 : index
    %13 = vector.load %arg3[%c0_7, %c0_8] : memref<4x16xf32, #tpu.memory_space<vmem>>, vector<1x16xf32>
    %14 = vector.shape_cast %13 : vector<1x16xf32> to vector<1x1x16xf32>
    %15 = vector.broadcast %14 : vector<1x1x16xf32> to vector<2x8x16xf32>
    %16 = arith.mulf %12, %15 : vector<2x8x16xf32>
    %17 = arith.addf %11, %16 : vector<2x8x16xf32>
    %18 = vector.extract_strided_slice %8 {offsets = [0, 1, 0], sizes = [2, 8, 16], strides = [1, 1, 1]} : vector<2x11x16xf32> to vector<2x8x16xf32>
    %c1 = arith.constant 1 : index
    %c0_9 = arith.constant 0 : index
    %19 = vector.load %arg3[%c1, %c0_9] : memref<4x16xf32, #tpu.memory_space<vmem>>, vector<1x16xf32>
    %20 = vector.shape_cast %19 : vector<1x16xf32> to vector<1x1x16xf32>
    %21 = vector.broadcast %20 : vector<1x1x16xf32> to vector<2x8x16xf32>
    %22 = arith.mulf %18, %21 : vector<2x8x16xf32>
    %23 = arith.addf %17, %22 : vector<2x8x16xf32>
    %24 = vector.extract_strided_slice %8 {offsets = [0, 2, 0], sizes = [2, 8, 16], strides = [1, 1, 1]} : vector<2x11x16xf32> to vector<2x8x16xf32>
    %c2 = arith.constant 2 : index
    %c0_10 = arith.constant 0 : index
    %25 = vector.load %arg3[%c2, %c0_10] : memref<4x16xf32, #tpu.memory_space<vmem>>, vector<1x16xf32>
    %26 = vector.shape_cast %25 : vector<1x16xf32> to vector<1x1x16xf32>
    %27 = vector.broadcast %26 : vector<1x1x16xf32> to vector<2x8x16xf32>
    %28 = arith.mulf %24, %27 : vector<2x8x16xf32>
    %29 = arith.addf %23, %28 : vector<2x8x16xf32>
    %30 = vector.extract_strided_slice %8 {offsets = [0, 3, 0], sizes = [2, 8, 16], strides = [1, 1, 1]} : vector<2x11x16xf32> to vector<2x8x16xf32>
    %c3 = arith.constant 3 : index
    %c0_11 = arith.constant 0 : index
    %31 = vector.load %arg3[%c3, %c0_11] : memref<4x16xf32, #tpu.memory_space<vmem>>, vector<1x16xf32>
    %32 = vector.shape_cast %31 : vector<1x16xf32> to vector<1x1x16xf32>
    %33 = vector.broadcast %32 : vector<1x1x16xf32> to vector<2x8x16xf32>
    %34 = arith.mulf %30, %33 : vector<2x8x16xf32>
    %35 = arith.addf %29, %34 : vector<2x8x16xf32>
    %cst_12 = arith.constant 0.000000e+00 : f32
    %36 = vector.broadcast %cst_12 : f32 to vector<2x8x16xf32>
    %37 = arith.subf %36, %35 : vector<2x8x16xf32>
    %38 = math.exp %37 : vector<2x8x16xf32>
    %cst_13 = arith.constant 1.000000e+00 : f32
    %39 = vector.broadcast %cst_13 : f32 to vector<2x8x16xf32>
    %40 = arith.addf %39, %38 : vector<2x8x16xf32>
    %cst_14 = arith.constant 1.000000e+00 : f32
    %41 = vector.broadcast %cst_14 : f32 to vector<2x8x16xf32>
    %42 = arith.divf %41, %40 : vector<2x8x16xf32>
    %43 = arith.mulf %35, %42 : vector<2x8x16xf32>
    %44 = vector.shape_cast %43 : vector<2x8x16xf32> to vector<16x16xf32>
    %c0_15 = arith.constant 0 : index
    %c0_16 = arith.constant 0 : index
    %45 = vector.load %arg5[%c0_15, %c0_16] : memref<16x9xf32, #tpu.memory_space<vmem>>, vector<16x9xf32>
    %cst_17 = arith.constant dense<0.000000e+00> : vector<16x9xf32>
    %46 = tpu.matmul %44, %45, %cst_17 {dimension_numbers = #tpu.dot_dimension_numbers<[1], [0], [0], [1], [0, 0, 1, 1], [], []>} : vector<16x16xf32>, vector<16x9xf32>, vector<16x9xf32> -> vector<16x9xf32>
    %47 = vector.extract_strided_slice %46 {offsets = [0, 0], sizes = [16, 1], strides = [1, 1]} : vector<16x9xf32> to vector<16x1xf32>
    %c0_18 = arith.constant 0 : index
    %c0_19 = arith.constant 0 : index
    %48 = vector.load %arg6[%c0_18, %c0_19] : memref<1x16xf32, #tpu.memory_space<vmem>>, vector<1x16xf32>
    %49 = vector.broadcast %47 : vector<16x1xf32> to vector<16x16xf32>
    %50 = vector.broadcast %48 : vector<1x16xf32> to vector<16x16xf32>
    %51 = arith.mulf %49, %50 : vector<16x16xf32>
    %c0_20 = arith.constant 0 : index
    %c0_21 = arith.constant 0 : index
    %52 = vector.load %arg7[%c0_20, %c0_21] : memref<1x16xf32, #tpu.memory_space<vmem>>, vector<1x16xf32>
    %53 = vector.broadcast %52 : vector<1x16xf32> to vector<16x16xf32>
    %54 = arith.addf %51, %53 : vector<16x16xf32>
    %cst_22 = arith.constant 2.000000e+01 : f32
    %55 = vector.broadcast %cst_22 : f32 to vector<16x16xf32>
    %56 = arith.cmpf ogt, %54, %55 : vector<16x16xf32>
    %cst_23 = arith.constant 2.000000e+01 : f32
    %57 = vector.broadcast %cst_23 : f32 to vector<16x16xf32>
    %58 = arith.minimumf %54, %57 : vector<16x16xf32>
    %59 = math.exp %58 : vector<16x16xf32>
    %cst_24 = arith.constant 1.000000e+00 : f32
    %60 = vector.broadcast %cst_24 : f32 to vector<16x16xf32>
    %61 = arith.addf %60, %59 : vector<16x16xf32>
    %62 = math.log %61 : vector<16x16xf32>
    %63 = arith.select %56, %54, %62 : vector<16x16xi1>, vector<16x16xf32>
    %64 = vector.shape_cast %63 : vector<16x16xf32> to vector<2x8x16xf32>
    %65 = vector.extract_strided_slice %46 {offsets = [0, 1], sizes = [16, 4], strides = [1, 1]} : vector<16x9xf32> to vector<16x4xf32>
    %66 = vector.shape_cast %65 : vector<16x4xf32> to vector<2x8x4xf32>
    %67 = tpu.transpose %66, [0, 2, 1] : vector<2x8x4xf32> -> vector<2x4x8xf32>
    %68 = vector.extract_strided_slice %46 {offsets = [0, 5], sizes = [16, 4], strides = [1, 1]} : vector<16x9xf32> to vector<16x4xf32>
    %69 = vector.shape_cast %68 : vector<16x4xf32> to vector<2x8x4xf32>
    %70 = tpu.transpose %69, [0, 2, 1] : vector<2x8x4xf32> -> vector<2x4x8xf32>
    %71 = vector.shape_cast %64 : vector<2x8x16xf32> to vector<2x8x1x16xf32>
    %c0_25 = arith.constant 0 : index
    %c0_26 = arith.constant 0 : index
    %72 = vector.load %arg8[%c0_25, %c0_26] : memref<4x16xf32, #tpu.memory_space<vmem>>, vector<4x16xf32>
    %73 = vector.shape_cast %72 : vector<4x16xf32> to vector<1x1x4x16xf32>
    %74 = vector.broadcast %71 : vector<2x8x1x16xf32> to vector<2x8x4x16xf32>
    %75 = vector.broadcast %73 : vector<1x1x4x16xf32> to vector<2x8x4x16xf32>
    %76 = arith.mulf %74, %75 : vector<2x8x4x16xf32>
    %77 = math.exp %76 : vector<2x8x4x16xf32>
    %78 = arith.mulf %64, %43 : vector<2x8x16xf32>
    %cst_27 = arith.constant 0.000000e+00 : f32
    %79 = vector.broadcast %cst_27 : f32 to vector<2x4x16xf32>
    %80 = vector.extract_strided_slice %67 {offsets = [0, 0, 0], sizes = [2, 4, 1], strides = [1, 1, 1]} : vector<2x4x8xf32> to vector<2x4x1xf32>
    %81 = vector.extract_strided_slice %70 {offsets = [0, 0, 0], sizes = [2, 4, 1], strides = [1, 1, 1]} : vector<2x4x8xf32> to vector<2x4x1xf32>
    %82 = vector.extract_strided_slice %77 {offsets = [0, 0, 0, 0], sizes = [2, 1, 4, 16], strides = [1, 1, 1, 1]} : vector<2x8x4x16xf32> to vector<2x1x4x16xf32>
    %83 = vector.shape_cast %82 : vector<2x1x4x16xf32> to vector<2x4x16xf32>
    %84 = arith.mulf %83, %79 : vector<2x4x16xf32>
    %85 = vector.extract_strided_slice %78 {offsets = [0, 0, 0], sizes = [2, 1, 16], strides = [1, 1, 1]} : vector<2x8x16xf32> to vector<2x1x16xf32>
    %86 = vector.broadcast %85 : vector<2x1x16xf32> to vector<2x4x16xf32>
    %87 = vector.broadcast %80 : vector<2x4x1xf32> to vector<2x4x16xf32>
    %88 = arith.mulf %86, %87 : vector<2x4x16xf32>
    %89 = arith.addf %84, %88 : vector<2x4x16xf32>
    %90 = vector.broadcast %81 : vector<2x4x1xf32> to vector<2x4x16xf32>
    %91 = arith.mulf %89, %90 : vector<2x4x16xf32>
    %cst_28 = arith.constant dense<0.000000e+00> : vector<2x16xf32>
    %92 = vector.multi_reduction <add>, %91, %cst_28 [1] : vector<2x4x16xf32> to vector<2x16xf32>
    %93 = vector.shape_cast %92 : vector<2x16xf32> to vector<2x1x16xf32>
    %c0_29 = arith.constant 0 : index
    %c0_30 = arith.constant 0 : index
    %c0_31 = arith.constant 0 : index
    %94 = vector.load %arg14[%c0_29, %c0_30, %c0_31] : memref<2x8x16xf32, #tpu.memory_space<vmem>>, vector<2x1x16xf32>
    tpu.vector_store %arg14[%c0_29, %c0_30, %c0_31], %93 {strides = array<i32>} : memref<2x8x16xf32, #tpu.memory_space<vmem>>, vector<2x1x16xf32>,
    %95 = vector.extract_strided_slice %67 {offsets = [0, 0, 1], sizes = [2, 4, 1], strides = [1, 1, 1]} : vector<2x4x8xf32> to vector<2x4x1xf32>
    %96 = vector.extract_strided_slice %70 {offsets = [0, 0, 1], sizes = [2, 4, 1], strides = [1, 1, 1]} : vector<2x4x8xf32> to vector<2x4x1xf32>
    %97 = vector.extract_strided_slice %77 {offsets = [0, 1, 0, 0], sizes = [2, 1, 4, 16], strides = [1, 1, 1, 1]} : vector<2x8x4x16xf32> to vector<2x1x4x16xf32>
    %98 = vector.shape_cast %97 : vector<2x1x4x16xf32> to vector<2x4x16xf32>
    %99 = arith.mulf %98, %89 : vector<2x4x16xf32>
    %100 = vector.extract_strided_slice %78 {offsets = [0, 1, 0], sizes = [2, 1, 16], strides = [1, 1, 1]} : vector<2x8x16xf32> to vector<2x1x16xf32>
    %101 = vector.broadcast %100 : vector<2x1x16xf32> to vector<2x4x16xf32>
    %102 = vector.broadcast %95 : vector<2x4x1xf32> to vector<2x4x16xf32>
    %103 = arith.mulf %101, %102 : vector<2x4x16xf32>
    %104 = arith.addf %99, %103 : vector<2x4x16xf32>
    %105 = vector.broadcast %96 : vector<2x4x1xf32> to vector<2x4x16xf32>
    %106 = arith.mulf %104, %105 : vector<2x4x16xf32>
    %cst_32 = arith.constant dense<0.000000e+00> : vector<2x16xf32>
    %107 = vector.multi_reduction <add>, %106, %cst_32 [1] : vector<2x4x16xf32> to vector<2x16xf32>
    %108 = vector.shape_cast %107 : vector<2x16xf32> to vector<2x1x16xf32>
    %c0_33 = arith.constant 0 : index
    %c1_34 = arith.constant 1 : index
    %c0_35 = arith.constant 0 : index
    %109 = vector.load %arg14[%c0_33, %c1_34, %c0_35] : memref<2x8x16xf32, #tpu.memory_space<vmem>>, vector<2x1x16xf32>
    tpu.vector_store %arg14[%c0_33, %c1_34, %c0_35], %108 {strides = array<i32>} : memref<2x8x16xf32, #tpu.memory_space<vmem>>, vector<2x1x16xf32>,
    %110 = vector.extract_strided_slice %67 {offsets = [0, 0, 2], sizes = [2, 4, 1], strides = [1, 1, 1]} : vector<2x4x8xf32> to vector<2x4x1xf32>
    %111 = vector.extract_strided_slice %70 {offsets = [0, 0, 2], sizes = [2, 4, 1], strides = [1, 1, 1]} : vector<2x4x8xf32> to vector<2x4x1xf32>
    %112 = vector.extract_strided_slice %77 {offsets = [0, 2, 0, 0], sizes = [2, 1, 4, 16], strides = [1, 1, 1, 1]} : vector<2x8x4x16xf32> to vector<2x1x4x16xf32>
    %113 = vector.shape_cast %112 : vector<2x1x4x16xf32> to vector<2x4x16xf32>
    %114 = arith.mulf %113, %104 : vector<2x4x16xf32>
    %115 = vector.extract_strided_slice %78 {offsets = [0, 2, 0], sizes = [2, 1, 16], strides = [1, 1, 1]} : vector<2x8x16xf32> to vector<2x1x16xf32>
    %116 = vector.broadcast %115 : vector<2x1x16xf32> to vector<2x4x16xf32>
    %117 = vector.broadcast %110 : vector<2x4x1xf32> to vector<2x4x16xf32>
    %118 = arith.mulf %116, %117 : vector<2x4x16xf32>
    %119 = arith.addf %114, %118 : vector<2x4x16xf32>
    %120 = vector.broadcast %111 : vector<2x4x1xf32> to vector<2x4x16xf32>
    %121 = arith.mulf %119, %120 : vector<2x4x16xf32>
    %cst_36 = arith.constant dense<0.000000e+00> : vector<2x16xf32>
    %122 = vector.multi_reduction <add>, %121, %cst_36 [1] : vector<2x4x16xf32> to vector<2x16xf32>
    %123 = vector.shape_cast %122 : vector<2x16xf32> to vector<2x1x16xf32>
    %c0_37 = arith.constant 0 : index
    %c2_38 = arith.constant 2 : index
    %c0_39 = arith.constant 0 : index
    %124 = vector.load %arg14[%c0_37, %c2_38, %c0_39] : memref<2x8x16xf32, #tpu.memory_space<vmem>>, vector<2x1x16xf32>
    tpu.vector_store %arg14[%c0_37, %c2_38, %c0_39], %123 {strides = array<i32>} : memref<2x8x16xf32, #tpu.memory_space<vmem>>, vector<2x1x16xf32>,
    %125 = vector.extract_strided_slice %67 {offsets = [0, 0, 3], sizes = [2, 4, 1], strides = [1, 1, 1]} : vector<2x4x8xf32> to vector<2x4x1xf32>
    %126 = vector.extract_strided_slice %70 {offsets = [0, 0, 3], sizes = [2, 4, 1], strides = [1, 1, 1]} : vector<2x4x8xf32> to vector<2x4x1xf32>
    %127 = vector.extract_strided_slice %77 {offsets = [0, 3, 0, 0], sizes = [2, 1, 4, 16], strides = [1, 1, 1, 1]} : vector<2x8x4x16xf32> to vector<2x1x4x16xf32>
    %128 = vector.shape_cast %127 : vector<2x1x4x16xf32> to vector<2x4x16xf32>
    %129 = arith.mulf %128, %119 : vector<2x4x16xf32>
    %130 = vector.extract_strided_slice %78 {offsets = [0, 3, 0], sizes = [2, 1, 16], strides = [1, 1, 1]} : vector<2x8x16xf32> to vector<2x1x16xf32>
    %131 = vector.broadcast %130 : vector<2x1x16xf32> to vector<2x4x16xf32>
    %132 = vector.broadcast %125 : vector<2x4x1xf32> to vector<2x4x16xf32>
    %133 = arith.mulf %131, %132 : vector<2x4x16xf32>
    %134 = arith.addf %129, %133 : vector<2x4x16xf32>
    %135 = vector.broadcast %126 : vector<2x4x1xf32> to vector<2x4x16xf32>
    %136 = arith.mulf %134, %135 : vector<2x4x16xf32>
    %cst_40 = arith.constant dense<0.000000e+00> : vector<2x16xf32>
    %137 = vector.multi_reduction <add>, %136, %cst_40 [1] : vector<2x4x16xf32> to vector<2x16xf32>
    %138 = vector.shape_cast %137 : vector<2x16xf32> to vector<2x1x16xf32>
    %c0_41 = arith.constant 0 : index
    %c3_42 = arith.constant 3 : index
    %c0_43 = arith.constant 0 : index
    %139 = vector.load %arg14[%c0_41, %c3_42, %c0_43] : memref<2x8x16xf32, #tpu.memory_space<vmem>>, vector<2x1x16xf32>
    tpu.vector_store %arg14[%c0_41, %c3_42, %c0_43], %138 {strides = array<i32>} : memref<2x8x16xf32, #tpu.memory_space<vmem>>, vector<2x1x16xf32>,
    %140 = vector.extract_strided_slice %67 {offsets = [0, 0, 4], sizes = [2, 4, 1], strides = [1, 1, 1]} : vector<2x4x8xf32> to vector<2x4x1xf32>
    %141 = vector.extract_strided_slice %70 {offsets = [0, 0, 4], sizes = [2, 4, 1], strides = [1, 1, 1]} : vector<2x4x8xf32> to vector<2x4x1xf32>
    %142 = vector.extract_strided_slice %77 {offsets = [0, 4, 0, 0], sizes = [2, 1, 4, 16], strides = [1, 1, 1, 1]} : vector<2x8x4x16xf32> to vector<2x1x4x16xf32>
    %143 = vector.shape_cast %142 : vector<2x1x4x16xf32> to vector<2x4x16xf32>
    %144 = arith.mulf %143, %134 : vector<2x4x16xf32>
    %145 = vector.extract_strided_slice %78 {offsets = [0, 4, 0], sizes = [2, 1, 16], strides = [1, 1, 1]} : vector<2x8x16xf32> to vector<2x1x16xf32>
    %146 = vector.broadcast %145 : vector<2x1x16xf32> to vector<2x4x16xf32>
    %147 = vector.broadcast %140 : vector<2x4x1xf32> to vector<2x4x16xf32>
    %148 = arith.mulf %146, %147 : vector<2x4x16xf32>
    %149 = arith.addf %144, %148 : vector<2x4x16xf32>
    %150 = vector.broadcast %141 : vector<2x4x1xf32> to vector<2x4x16xf32>
    %151 = arith.mulf %149, %150 : vector<2x4x16xf32>
    %cst_44 = arith.constant dense<0.000000e+00> : vector<2x16xf32>
    %152 = vector.multi_reduction <add>, %151, %cst_44 [1] : vector<2x4x16xf32> to vector<2x16xf32>
    %153 = vector.shape_cast %152 : vector<2x16xf32> to vector<2x1x16xf32>
    %c0_45 = arith.constant 0 : index
    %c4 = arith.constant 4 : index
    %c0_46 = arith.constant 0 : index
    %154 = vector.load %arg14[%c0_45, %c4, %c0_46] : memref<2x8x16xf32, #tpu.memory_space<vmem>>, vector<2x1x16xf32>
    tpu.vector_store %arg14[%c0_45, %c4, %c0_46], %153 {strides = array<i32>} : memref<2x8x16xf32, #tpu.memory_space<vmem>>, vector<2x1x16xf32>,
    %155 = vector.extract_strided_slice %67 {offsets = [0, 0, 5], sizes = [2, 4, 1], strides = [1, 1, 1]} : vector<2x4x8xf32> to vector<2x4x1xf32>
    %156 = vector.extract_strided_slice %70 {offsets = [0, 0, 5], sizes = [2, 4, 1], strides = [1, 1, 1]} : vector<2x4x8xf32> to vector<2x4x1xf32>
    %157 = vector.extract_strided_slice %77 {offsets = [0, 5, 0, 0], sizes = [2, 1, 4, 16], strides = [1, 1, 1, 1]} : vector<2x8x4x16xf32> to vector<2x1x4x16xf32>
    %158 = vector.shape_cast %157 : vector<2x1x4x16xf32> to vector<2x4x16xf32>
    %159 = arith.mulf %158, %149 : vector<2x4x16xf32>
    %160 = vector.extract_strided_slice %78 {offsets = [0, 5, 0], sizes = [2, 1, 16], strides = [1, 1, 1]} : vector<2x8x16xf32> to vector<2x1x16xf32>
    %161 = vector.broadcast %160 : vector<2x1x16xf32> to vector<2x4x16xf32>
    %162 = vector.broadcast %155 : vector<2x4x1xf32> to vector<2x4x16xf32>
    %163 = arith.mulf %161, %162 : vector<2x4x16xf32>
    %164 = arith.addf %159, %163 : vector<2x4x16xf32>
    %165 = vector.broadcast %156 : vector<2x4x1xf32> to vector<2x4x16xf32>
    %166 = arith.mulf %164, %165 : vector<2x4x16xf32>
    %cst_47 = arith.constant dense<0.000000e+00> : vector<2x16xf32>
    %167 = vector.multi_reduction <add>, %166, %cst_47 [1] : vector<2x4x16xf32> to vector<2x16xf32>
    %168 = vector.shape_cast %167 : vector<2x16xf32> to vector<2x1x16xf32>
    %c0_48 = arith.constant 0 : index
    %c5 = arith.constant 5 : index
    %c0_49 = arith.constant 0 : index
    %169 = vector.load %arg14[%c0_48, %c5, %c0_49] : memref<2x8x16xf32, #tpu.memory_space<vmem>>, vector<2x1x16xf32>
    tpu.vector_store %arg14[%c0_48, %c5, %c0_49], %168 {strides = array<i32>} : memref<2x8x16xf32, #tpu.memory_space<vmem>>, vector<2x1x16xf32>,
    %170 = vector.extract_strided_slice %67 {offsets = [0, 0, 6], sizes = [2, 4, 1], strides = [1, 1, 1]} : vector<2x4x8xf32> to vector<2x4x1xf32>
    %171 = vector.extract_strided_slice %70 {offsets = [0, 0, 6], sizes = [2, 4, 1], strides = [1, 1, 1]} : vector<2x4x8xf32> to vector<2x4x1xf32>
    %172 = vector.extract_strided_slice %77 {offsets = [0, 6, 0, 0], sizes = [2, 1, 4, 16], strides = [1, 1, 1, 1]} : vector<2x8x4x16xf32> to vector<2x1x4x16xf32>
    %173 = vector.shape_cast %172 : vector<2x1x4x16xf32> to vector<2x4x16xf32>
    %174 = arith.mulf %173, %164 : vector<2x4x16xf32>
    %175 = vector.extract_strided_slice %78 {offsets = [0, 6, 0], sizes = [2, 1, 16], strides = [1, 1, 1]} : vector<2x8x16xf32> to vector<2x1x16xf32>
    %176 = vector.broadcast %175 : vector<2x1x16xf32> to vector<2x4x16xf32>
    %177 = vector.broadcast %170 : vector<2x4x1xf32> to vector<2x4x16xf32>
    %178 = arith.mulf %176, %177 : vector<2x4x16xf32>
    %179 = arith.addf %174, %178 : vector<2x4x16xf32>
    %180 = vector.broadcast %171 : vector<2x4x1xf32> to vector<2x4x16xf32>
    %181 = arith.mulf %179, %180 : vector<2x4x16xf32>
    %cst_50 = arith.constant dense<0.000000e+00> : vector<2x16xf32>
    %182 = vector.multi_reduction <add>, %181, %cst_50 [1] : vector<2x4x16xf32> to vector<2x16xf32>
    %183 = vector.shape_cast %182 : vector<2x16xf32> to vector<2x1x16xf32>
    %c0_51 = arith.constant 0 : index
    %c6 = arith.constant 6 : index
    %c0_52 = arith.constant 0 : index
    %184 = vector.load %arg14[%c0_51, %c6, %c0_52] : memref<2x8x16xf32, #tpu.memory_space<vmem>>, vector<2x1x16xf32>
    tpu.vector_store %arg14[%c0_51, %c6, %c0_52], %183 {strides = array<i32>} : memref<2x8x16xf32, #tpu.memory_space<vmem>>, vector<2x1x16xf32>,
    %185 = vector.extract_strided_slice %67 {offsets = [0, 0, 7], sizes = [2, 4, 1], strides = [1, 1, 1]} : vector<2x4x8xf32> to vector<2x4x1xf32>
    %186 = vector.extract_strided_slice %70 {offsets = [0, 0, 7], sizes = [2, 4, 1], strides = [1, 1, 1]} : vector<2x4x8xf32> to vector<2x4x1xf32>
    %187 = vector.extract_strided_slice %77 {offsets = [0, 7, 0, 0], sizes = [2, 1, 4, 16], strides = [1, 1, 1, 1]} : vector<2x8x4x16xf32> to vector<2x1x4x16xf32>
    %188 = vector.shape_cast %187 : vector<2x1x4x16xf32> to vector<2x4x16xf32>
    %189 = arith.mulf %188, %179 : vector<2x4x16xf32>
    %190 = vector.extract_strided_slice %78 {offsets = [0, 7, 0], sizes = [2, 1, 16], strides = [1, 1, 1]} : vector<2x8x16xf32> to vector<2x1x16xf32>
    %191 = vector.broadcast %190 : vector<2x1x16xf32> to vector<2x4x16xf32>
    %192 = vector.broadcast %185 : vector<2x4x1xf32> to vector<2x4x16xf32>
    %193 = arith.mulf %191, %192 : vector<2x4x16xf32>
    %194 = arith.addf %189, %193 : vector<2x4x16xf32>
    %195 = vector.broadcast %186 : vector<2x4x1xf32> to vector<2x4x16xf32>
    %196 = arith.mulf %194, %195 : vector<2x4x16xf32>
    %cst_53 = arith.constant dense<0.000000e+00> : vector<2x16xf32>
    %197 = vector.multi_reduction <add>, %196, %cst_53 [1] : vector<2x4x16xf32> to vector<2x16xf32>
    %198 = vector.shape_cast %197 : vector<2x16xf32> to vector<2x1x16xf32>
    %c0_54 = arith.constant 0 : index
    %c7 = arith.constant 7 : index
    %c0_55 = arith.constant 0 : index
    %199 = vector.load %arg14[%c0_54, %c7, %c0_55] : memref<2x8x16xf32, #tpu.memory_space<vmem>>, vector<2x1x16xf32>
    tpu.vector_store %arg14[%c0_54, %c7, %c0_55], %198 {strides = array<i32>} : memref<2x8x16xf32, #tpu.memory_space<vmem>>, vector<2x1x16xf32>,
    %c0_56 = arith.constant 0 : index
    %c0_57 = arith.constant 0 : index
    %c0_58 = arith.constant 0 : index
    %200 = vector.load %arg14[%c0_56, %c0_57, %c0_58] : memref<2x8x16xf32, #tpu.memory_space<vmem>>, vector<2x8x16xf32>
    %c0_59 = arith.constant 0 : index
    %c0_60 = arith.constant 0 : index
    %201 = vector.load %arg9[%c0_59, %c0_60] : memref<1x16xf32, #tpu.memory_space<vmem>>, vector<1x16xf32>
    %202 = vector.shape_cast %201 : vector<1x16xf32> to vector<1x1x16xf32>
    %203 = vector.broadcast %202 : vector<1x1x16xf32> to vector<2x8x16xf32>
    %204 = arith.mulf %203, %43 : vector<2x8x16xf32>
    %205 = arith.addf %200, %204 : vector<2x8x16xf32>
    %206 = vector.shape_cast %205 : vector<2x8x16xf32> to vector<16x16xf32>
    %cst_61 = arith.constant 0.000000e+00 : f32
    %207 = vector.broadcast %cst_61 : f32 to vector<16x16xf32>
    %208 = arith.subf %207, %5 : vector<16x16xf32>
    %209 = math.exp %208 : vector<16x16xf32>
    %cst_62 = arith.constant 1.000000e+00 : f32
    %210 = vector.broadcast %cst_62 : f32 to vector<16x16xf32>
    %211 = arith.addf %210, %209 : vector<16x16xf32>
    %cst_63 = arith.constant 1.000000e+00 : f32
    %212 = vector.broadcast %cst_63 : f32 to vector<16x16xf32>
    %213 = arith.divf %212, %211 : vector<16x16xf32>
    %214 = arith.mulf %5, %213 : vector<16x16xf32>
    %215 = arith.mulf %206, %214 : vector<16x16xf32>
    %c0_64 = arith.constant 0 : index
    %c0_65 = arith.constant 0 : index
    %216 = vector.load %arg10[%c0_64, %c0_65] : memref<16x8xf32, #tpu.memory_space<vmem>>, vector<16x8xf32>
    %cst_66 = arith.constant dense<0.000000e+00> : vector<16x8xf32>
    %217 = tpu.matmul %215, %216, %cst_66 {dimension_numbers = #tpu.dot_dimension_numbers<[1], [0], [0], [1], [0, 0, 1, 1], [], []>} : vector<16x16xf32>, vector<16x8xf32>, vector<16x8xf32> -> vector<16x8xf32>
    %218 = vector.shape_cast %217 : vector<16x8xf32> to vector<2x8x8xf32>
    %219 = vector.extract_strided_slice %218 {offsets = [0, 0, 0], sizes = [2, 1, 8], strides = [1, 1, 1]} : vector<2x8x8xf32> to vector<2x1x8xf32>
    %220 = vector.shape_cast %219 : vector<2x1x8xf32> to vector<2x8xf32>
    %c0_67 = arith.constant 0 : index
    %c0_68 = arith.constant 0 : index
    %221 = vector.load %arg15[%c0_67, %c0_68] : memref<2x64xf32, #tpu.memory_space<vmem>>, vector<2x8xf32>
    tpu.vector_store %arg15[%c0_67, %c0_68], %220 {strides = array<i32>} : memref<2x64xf32, #tpu.memory_space<vmem>>, vector<2x8xf32>,
    %222 = vector.extract_strided_slice %218 {offsets = [0, 1, 0], sizes = [2, 1, 8], strides = [1, 1, 1]} : vector<2x8x8xf32> to vector<2x1x8xf32>
    %223 = vector.shape_cast %222 : vector<2x1x8xf32> to vector<2x8xf32>
    %c0_69 = arith.constant 0 : index
    %c8 = arith.constant 8 : index
    %224 = vector.load %arg15[%c0_69, %c8] : memref<2x64xf32, #tpu.memory_space<vmem>>, vector<2x8xf32>
    tpu.vector_store %arg15[%c0_69, %c8], %223 {strides = array<i32>} : memref<2x64xf32, #tpu.memory_space<vmem>>, vector<2x8xf32>,
    %225 = vector.extract_strided_slice %218 {offsets = [0, 2, 0], sizes = [2, 1, 8], strides = [1, 1, 1]} : vector<2x8x8xf32> to vector<2x1x8xf32>
    %226 = vector.shape_cast %225 : vector<2x1x8xf32> to vector<2x8xf32>
    %c0_70 = arith.constant 0 : index
    %c16 = arith.constant 16 : index
    %227 = vector.load %arg15[%c0_70, %c16] : memref<2x64xf32, #tpu.memory_space<vmem>>, vector<2x8xf32>
    tpu.vector_store %arg15[%c0_70, %c16], %226 {strides = array<i32>} : memref<2x64xf32, #tpu.memory_space<vmem>>, vector<2x8xf32>,
    %228 = vector.extract_strided_slice %218 {offsets = [0, 3, 0], sizes = [2, 1, 8], strides = [1, 1, 1]} : vector<2x8x8xf32> to vector<2x1x8xf32>
    %229 = vector.shape_cast %228 : vector<2x1x8xf32> to vector<2x8xf32>
    %c0_71 = arith.constant 0 : index
    %c24 = arith.constant 24 : index
    %230 = vector.load %arg15[%c0_71, %c24] : memref<2x64xf32, #tpu.memory_space<vmem>>, vector<2x8xf32>
    tpu.vector_store %arg15[%c0_71, %c24], %229 {strides = array<i32>} : memref<2x64xf32, #tpu.memory_space<vmem>>, vector<2x8xf32>,
    %231 = vector.extract_strided_slice %218 {offsets = [0, 4, 0], sizes = [2, 1, 8], strides = [1, 1, 1]} : vector<2x8x8xf32> to vector<2x1x8xf32>
    %232 = vector.shape_cast %231 : vector<2x1x8xf32> to vector<2x8xf32>
    %c0_72 = arith.constant 0 : index
    %c32 = arith.constant 32 : index
    %233 = vector.load %arg15[%c0_72, %c32] : memref<2x64xf32, #tpu.memory_space<vmem>>, vector<2x8xf32>
    tpu.vector_store %arg15[%c0_72, %c32], %232 {strides = array<i32>} : memref<2x64xf32, #tpu.memory_space<vmem>>, vector<2x8xf32>,
    %234 = vector.extract_strided_slice %218 {offsets = [0, 5, 0], sizes = [2, 1, 8], strides = [1, 1, 1]} : vector<2x8x8xf32> to vector<2x1x8xf32>
    %235 = vector.shape_cast %234 : vector<2x1x8xf32> to vector<2x8xf32>
    %c0_73 = arith.constant 0 : index
    %c40 = arith.constant 40 : index
    %236 = vector.load %arg15[%c0_73, %c40] : memref<2x64xf32, #tpu.memory_space<vmem>>, vector<2x8xf32>
    tpu.vector_store %arg15[%c0_73, %c40], %235 {strides = array<i32>} : memref<2x64xf32, #tpu.memory_space<vmem>>, vector<2x8xf32>,
    %237 = vector.extract_strided_slice %218 {offsets = [0, 6, 0], sizes = [2, 1, 8], strides = [1, 1, 1]} : vector<2x8x8xf32> to vector<2x1x8xf32>
    %238 = vector.shape_cast %237 : vector<2x1x8xf32> to vector<2x8xf32>
    %c0_74 = arith.constant 0 : index
    %c48 = arith.constant 48 : index
    %239 = vector.load %arg15[%c0_74, %c48] : memref<2x64xf32, #tpu.memory_space<vmem>>, vector<2x8xf32>
    tpu.vector_store %arg15[%c0_74, %c48], %238 {strides = array<i32>} : memref<2x64xf32, #tpu.memory_space<vmem>>, vector<2x8xf32>,
    %240 = vector.extract_strided_slice %218 {offsets = [0, 7, 0], sizes = [2, 1, 8], strides = [1, 1, 1]} : vector<2x8x8xf32> to vector<2x1x8xf32>
    %241 = vector.shape_cast %240 : vector<2x1x8xf32> to vector<2x8xf32>
    %c0_75 = arith.constant 0 : index
    %c56 = arith.constant 56 : index
    %242 = vector.load %arg15[%c0_75, %c56] : memref<2x64xf32, #tpu.memory_space<vmem>>, vector<2x8xf32>
    tpu.vector_store %arg15[%c0_75, %c56], %241 {strides = array<i32>} : memref<2x64xf32, #tpu.memory_space<vmem>>, vector<2x8xf32>,
    %c0_76 = arith.constant 0 : index
    %c0_77 = arith.constant 0 : index
    %243 = vector.load %arg15[%c0_76, %c0_77] : memref<2x64xf32, #tpu.memory_space<vmem>>, vector<2x64xf32>
    %c0_78 = arith.constant 0 : index
    %c0_79 = arith.constant 0 : index
    %244 = vector.load %arg11[%c0_78, %c0_79] : memref<64x16xf32, #tpu.memory_space<vmem>>, vector<64x16xf32>
    %cst_80 = arith.constant dense<0.000000e+00> : vector<2x16xf32>
    %245 = tpu.matmul %243, %244, %cst_80 {dimension_numbers = #tpu.dot_dimension_numbers<[1], [0], [0], [1], [0, 0, 1, 1], [], []>} : vector<2x64xf32>, vector<64x16xf32>, vector<2x16xf32> -> vector<2x16xf32>
    %c0_81 = arith.constant 0 : index
    %c0_82 = arith.constant 0 : index
    %246 = vector.load %arg12[%c0_81, %c0_82] : memref<1x16xf32, #tpu.memory_space<vmem>>, vector<1x16xf32>
    %247 = vector.broadcast %246 : vector<1x16xf32> to vector<2x16xf32>
    %248 = arith.addf %245, %247 : vector<2x16xf32>
    %c0_83 = arith.constant 0 : index
    %c0_84 = arith.constant 0 : index
    %249 = vector.load %arg13[%c0_83, %c0_84] : memref<2x16xf32, #tpu.memory_space<vmem>>, vector<2x16xf32>
    tpu.vector_store %arg13[%c0_83, %c0_84], %248 {strides = array<i32>} : memref<2x16xf32, #tpu.memory_space<vmem>>, vector<2x16xf32>,
    return
  }
  func.func @transform_0(%arg0: i32) -> (i32, i32, i32) {
    %c0_i32 = arith.constant 0 : i32
    %c0_i32_0 = arith.constant 0 : i32
    %c0_i32_1 = arith.constant 0 : i32
    return %arg0, %c0_i32, %c0_i32_0 : i32, i32, i32
  }
  func.func @transform_1(%arg0: i32) -> (i32, i32) {
    %c0_i32 = arith.constant 0 : i32
    %c0_i32_0 = arith.constant 0 : i32
    %c0_i32_1 = arith.constant 0 : i32
    return %c0_i32, %c0_i32_0 : i32, i32
  }
  func.func @transform_2(%arg0: i32) -> (i32, i32) {
    %c0_i32 = arith.constant 0 : i32
    %c0_i32_0 = arith.constant 0 : i32
    %c0_i32_1 = arith.constant 0 : i32
    return %c0_i32, %c0_i32_0 : i32, i32
  }
  func.func @transform_3(%arg0: i32) -> (i32, i32) {
    %c0_i32 = arith.constant 0 : i32
    %c0_i32_0 = arith.constant 0 : i32
    %c0_i32_1 = arith.constant 0 : i32
    return %c0_i32, %c0_i32_0 : i32, i32
  }
  func.func @transform_4(%arg0: i32) -> (i32, i32) {
    %c0_i32 = arith.constant 0 : i32
    %c0_i32_0 = arith.constant 0 : i32
    %c0_i32_1 = arith.constant 0 : i32
    return %c0_i32, %c0_i32_0 : i32, i32
  }
  func.func @transform_5(%arg0: i32) -> (i32, i32) {
    %c0_i32 = arith.constant 0 : i32
    %c0_i32_0 = arith.constant 0 : i32
    %c0_i32_1 = arith.constant 0 : i32
    return %c0_i32, %c0_i32_0 : i32, i32
  }
  func.func @transform_6(%arg0: i32) -> (i32, i32) {
    %c0_i32 = arith.constant 0 : i32
    %c0_i32_0 = arith.constant 0 : i32
    %c0_i32_1 = arith.constant 0 : i32
    return %c0_i32, %c0_i32_0 : i32, i32
  }
  func.func @transform_7(%arg0: i32) -> (i32, i32) {
    %c0_i32 = arith.constant 0 : i32
    %c0_i32_0 = arith.constant 0 : i32
    %c0_i32_1 = arith.constant 0 : i32
    return %c0_i32, %c0_i32_0 : i32, i32
  }
  func.func @transform_8(%arg0: i32) -> (i32, i32) {
    %c0_i32 = arith.constant 0 : i32
    %c0_i32_0 = arith.constant 0 : i32
    %c0_i32_1 = arith.constant 0 : i32
    return %c0_i32, %c0_i32_0 : i32, i32
  }
  func.func @transform_9(%arg0: i32) -> (i32, i32) {
    %c0_i32 = arith.constant 0 : i32
    %c0_i32_0 = arith.constant 0 : i32
    %c0_i32_1 = arith.constant 0 : i32
    return %c0_i32, %c0_i32_0 : i32, i32
  }
  func.func @transform_10(%arg0: i32) -> (i32, i32) {
    %c0_i32 = arith.constant 0 : i32
    %c0_i32_0 = arith.constant 0 : i32
    %c0_i32_1 = arith.constant 0 : i32
    return %c0_i32, %c0_i32_0 : i32, i32
  }
  func.func @transform_11(%arg0: i32) -> (i32, i32) {
    %c0_i32 = arith.constant 0 : i32
    %c0_i32_0 = arith.constant 0 : i32
    %c0_i32_1 = arith.constant 0 : i32
    return %c0_i32, %c0_i32_0 : i32, i32
  }
  func.func @transform_12(%arg0: i32) -> (i32, i32) {
    %c0_i32 = arith.constant 0 : i32
    %c0_i32_0 = arith.constant 0 : i32
    return %arg0, %c0_i32 : i32, i32
  }
}

</mosaic_0001>

<llo_original>
// kernel: tpu_custom_call.1
$region0: #{tpu_custom_call.1}
  #allocation0 [shape = 'u32[]', space=smem, size = 0x4, offset = 0x4, fixed_abs, tag = 'smem constant byte address 0x4 - core index']
  #allocation1 [shape = 'u32[144,128]{1,0:T(1,128)}', space=vmem, size = 0x12000, scoped, tag = 'internal scratch']
  #allocation2 [shape = 'f32[2,8,16]{2,1,0:T(8,128)}', space=vmem, size = 0x2000, scoped, tag = 'scratch operand']
  #allocation3 [shape = 'f32[2,64]{1,0:T(2,128)}', space=vmem, size = 0x400, scoped, tag = 'scratch operand']
  %s0 = inlined_call_operand.vmem [shape: f32[2,8,8], index: 0, kind: input, shape index: {}]
  %s1 = inlined_call_operand.vmem [shape: f32[8,32], index: 1, kind: input, shape index: {}]
  %s2 = inlined_call_operand.vmem [shape: f32[4,16], index: 2, kind: input, shape index: {}]
  %s3 = inlined_call_operand.vmem [shape: f32[1,16], index: 3, kind: input, shape index: {}]
  %s4 = inlined_call_operand.vmem [shape: f32[16,9], index: 4, kind: input, shape index: {}]
  %s5 = inlined_call_operand.vmem [shape: f32[1,16], index: 5, kind: input, shape index: {}]
  %s6 = inlined_call_operand.vmem [shape: f32[1,16], index: 6, kind: input, shape index: {}]
  %s7 = inlined_call_operand.vmem [shape: f32[4,16], index: 7, kind: input, shape index: {}]
  %s8 = inlined_call_operand.vmem [shape: f32[1,16], index: 8, kind: input, shape index: {}]
  %s9 = inlined_call_operand.vmem [shape: f32[16,8], index: 9, kind: input, shape index: {}]
  %s10 = inlined_call_operand.vmem [shape: f32[64,16], index: 10, kind: input, shape index: {}]
  %s11 = inlined_call_operand.vmem [shape: f32[1,16], index: 11, kind: input, shape index: {}]
  %s12 = inlined_call_operand.hbm [shape: f32[2,16], index: 12, kind: output, shape index: {}]
  %s13 = sld [smem:[#allocation0]]
  $region58: #{tpu_custom_call.1} parent=0
    _
  %s15 = ssub.s32 1, %s13
  %s16 = scalar_select 0, %s15, %s13
  $region1: #{tpu_custom_call.1} parent=0
    #allocation4 [shape = 'u8[1024]{0}', space=vmem, size = 0x400, scoped, tag = 'output window, operand 0, single buffered']
    #allocation5 [shape = 's32[1]{0}', space=sflag, size = 0x4, scoped, tag = 'scoped memory for tpu_custom_call.1']
    %17 = vsyncpa [#allocation5], 0
    // Predicated region
    $region2: #{tpu_custom_call.1} parent=1 // pred_check
      _
    $region3: #{tpu_custom_call.1} parent=1 // pred_check_branch
      %19 = sbr.rel (0) target = $region5
    $region4: #{tpu_custom_call.1} parent=1 // pred_region
      _
    $region5: #{tpu_custom_call.1} parent=1 // pred_fallthru
      _
    // Predicated region
    $region6: #{tpu_custom_call.1} parent=1 // pred_check
      _
    $region7: #{tpu_custom_call.1} parent=1 // pred_check_branch
      %21 = sbr.rel (0) target = $region9
    $region8: #{tpu_custom_call.1} parent=1 // pred_region
      _
    $region9: #{tpu_custom_call.1} parent=1 // pred_fallthru
      _
    // Predicated region
    $region10: #{tpu_custom_call.1} parent=1 // pred_check
      _
    $region11: #{tpu_custom_call.1} parent=1 // pred_check_branch
      %23 = sbr.rel (0) target = $region13
    $region12: #{tpu_custom_call.1} parent=1 // pred_region
      _
    $region13: #{tpu_custom_call.1} parent=1 // pred_fallthru
      _
    // Predicated region
    $region14: #{tpu_custom_call.1} parent=1 // pred_check
      _
    $region15: #{tpu_custom_call.1} parent=1 // pred_check_branch
      %25 = sbr.rel (0) target = $region17
    $region16: #{tpu_custom_call.1} parent=1 // pred_region
      _
    $region17: #{tpu_custom_call.1} parent=1 // pred_fallthru
      _
    // Predicated region
    $region18: #{tpu_custom_call.1} parent=1 // pred_check
      _
    $region19: #{tpu_custom_call.1} parent=1 // pred_check_branch
      %27 = sbr.rel (0) target = $region21
    $region20: #{tpu_custom_call.1} parent=1 // pred_region
      _
    $region21: #{tpu_custom_call.1} parent=1 // pred_fallthru
      _
    // Predicated region
    $region22: #{tpu_custom_call.1} parent=1 // pred_check
      _
    $region23: #{tpu_custom_call.1} parent=1 // pred_check_branch
      %29 = sbr.rel (0) target = $region25
    $region24: #{tpu_custom_call.1} parent=1 // pred_region
      _
    $region25: #{tpu_custom_call.1} parent=1 // pred_fallthru
      _
    // Predicated region
    $region26: #{tpu_custom_call.1} parent=1 // pred_check
      _
    $region27: #{tpu_custom_call.1} parent=1 // pred_check_branch
      %31 = sbr.rel (0) target = $region29
    $region28: #{tpu_custom_call.1} parent=1 // pred_region
      _
    $region29: #{tpu_custom_call.1} parent=1 // pred_fallthru
      _
    // Predicated region
    $region30: #{tpu_custom_call.1} parent=1 // pred_check
      _
    $region31: #{tpu_custom_call.1} parent=1 // pred_check_branch
      %33 = sbr.rel (0) target = $region33
    $region32: #{tpu_custom_call.1} parent=1 // pred_region
      _
    $region33: #{tpu_custom_call.1} parent=1 // pred_fallthru
      _
    // Predicated region
    $region34: #{tpu_custom_call.1} parent=1 // pred_check
      _
    $region35: #{tpu_custom_call.1} parent=1 // pred_check_branch
      %35 = sbr.rel (0) target = $region37
    $region36: #{tpu_custom_call.1} parent=1 // pred_region
      _
    $region37: #{tpu_custom_call.1} parent=1 // pred_fallthru
      _
    // Predicated region
    $region38: #{tpu_custom_call.1} parent=1 // pred_check
      _
    $region39: #{tpu_custom_call.1} parent=1 // pred_check_branch
      %37 = sbr.rel (0) target = $region41
    $region40: #{tpu_custom_call.1} parent=1 // pred_region
      _
    $region41: #{tpu_custom_call.1} parent=1 // pred_fallthru
      _
    // Predicated region
    $region42: #{tpu_custom_call.1} parent=1 // pred_check
      _
    $region43: #{tpu_custom_call.1} parent=1 // pred_check_branch
      %39 = sbr.rel (0) target = $region45
    $region44: #{tpu_custom_call.1} parent=1 // pred_region
      _
    $region45: #{tpu_custom_call.1} parent=1 // pred_fallthru
      _
    // Predicated region
    $region46: #{tpu_custom_call.1} parent=1 // pred_check
      _
    $region47: #{tpu_custom_call.1} parent=1 // pred_check_branch
      %41 = sbr.rel (0) target = $region49
    $region48: #{tpu_custom_call.1} parent=1 // pred_region
      _
    $region49: #{tpu_custom_call.1} parent=1 // pred_fallthru
      _
    %v42 = vld [vmem:[%s0] sm:$0xff]
    %v43 = vld [vmem:[%s0 + $0x8] sm:$0xff]
    %v44 = vld [vmem:[%s1] sm:$0xff]
    %vm45 = vcmask 64512
    %v47 = vsel %vm45, %v42, 0
    %v50 = vsel %vm45, %v43, 0
    %52 = vmatprep.subr.mxu0 0.0
    %53 = vmatpush1.msra.mxu0 %v44
    %54 = vmatprep.subr.mxu0 0.0
    %55 = vmatpush1.msra.mxu0 0.0
    %56 = vmatprep.subr.mxu0 0.0
    %57 = vmatpush1.msra.mxu0 0.0
    %58 = vmatprep.subr.mxu0 0.0
    %59 = vmatpush1.msra.mxu0 0.0
    %60 = vmatprep.subr.mxu0 0.0
    %61 = vmatpush1.msra.mxu0 0.0
    %62 = vmatprep.subr.mxu0 0.0
    %63 = vmatpush1.msra.mxu0 0.0
    %64 = vmatprep.subr.mxu0 0.0
    %65 = vmatpush1.msra.mxu0 0.0
    %66 = vmatprep.subr.mxu0 0.0
    %67 = vmatpush1.msra.mxu0 0.0
    %68 = vmatprep.subr.mxu0 0.0
    %69 = vmatpush1.msra.mxu0 0.0
    %70 = vmatprep.subr.mxu0 0.0
    %71 = vmatpush1.msra.mxu0 0.0
    %72 = vmatprep.subr.mxu0 0.0
    %73 = vmatpush1.msra.mxu0 0.0
    %74 = vmatprep.subr.mxu0 0.0
    %75 = vmatpush1.msra.mxu0 0.0
    %76 = vmatprep.subr.mxu0 0.0
    %77 = vmatpush1.msra.mxu0 0.0
    %78 = vmatprep.subr.mxu0 0.0
    %79 = vmatpush1.msra.mxu0 0.0
    %80 = vmatprep.subr.mxu0 0.0
    %81 = vmatpush1.msra.mxu0 0.0
    %82 = vmatprep.subr.mxu0 0.0
    %83 = vmatpush1.msra.mxu0 0.0
    %84 = vmatprep.subr.mxu0 0.0
    %85 = vmatpush1.msra.mxu0 0.0
    %86 = vmatprep.subr.mxu0 0.0
    %87 = vmatpush1.msra.mxu0 0.0
    %88 = vmatprep.subr.mxu0 0.0
    %89 = vmatpush1.msra.mxu0 0.0
    %90 = vmatprep.subr.mxu0 0.0
    %91 = vmatpush1.msra.mxu0 0.0
    %92 = vmatprep.subr.mxu0 0.0
    %93 = vmatpush1.msra.mxu0 0.0
    %94 = vmatprep.subr.mxu0 0.0
    %95 = vmatpush1.msra.mxu0 0.0
    %96 = vmatprep.subr.mxu0 0.0
    %97 = vmatpush1.msra.mxu0 0.0
    %98 = vmatprep.subr.mxu0 0.0
    %99 = vmatpush1.msra.mxu0 0.0
    %100 = vmatprep.subr.mxu0 0.0
    %101 = vmatpush1.msra.mxu0 0.0
    %102 = vmatprep.subr.mxu0 0.0
    %103 = vmatpush1.msra.mxu0 0.0
    %104 = vmatprep.subr.mxu0 0.0
    %105 = vmatpush1.msra.mxu0 0.0
    %106 = vmatprep.subr.mxu0 0.0
    %107 = vmatpush1.msra.mxu0 0.0
    %108 = vmatprep.subr.mxu0 0.0
    %109 = vmatpush1.msra.mxu0 0.0
    %110 = vmatprep.subr.mxu0 0.0
    %111 = vmatpush1.msra.mxu0 0.0
    %112 = vmatprep.subr.mxu0 0.0
    %113 = vmatpush1.msra.mxu0 0.0
    %114 = vmatprep.subr.mxu0 0.0
    %115 = vmatpush1.msra.mxu0 0.0
    %116 = vmatprep.mubr.f32.mxu0 0.0
    %117 = vmatmul.mubr.f32.gmra.mrb[0].mxu0 %v47
    %v118 = vpop.f32.mrb[0].mxu0
    %v119 = vadd.f32 0.0, %v118
    %v120 = vpop.f32.mrb[0].mxu0
    %121 = vmatprep.mubr.f32.mxu0 0.0
    %122 = vmatmul.mubr.f32.gmra.mrb[0].mxu0 %v50
    %v123 = vpop.f32.mrb[0].mxu0
    %v124 = vadd.f32 0.0, %v123
    %v125 = vpop.f32.mrb[0].mxu0
    %126 = vdwg.mxu0
    %v129 = vrot.slane %v119, 5
    %v130 = vrot.slane %v124, 5
    %vm133 = vcmask 1042432
    %v134 = vsel %vm133, 0.0, %v129
    %v135 = vsel %vm133, 0.0, %v130
    %v136 = vld [vmem:[%s3] sm:$0x1]
    %v138 = vlaneseq
    %v139 = vshrl.u32 %v138, 7
    %v140 = vsub.s32 0, %v139
    %v141 = vrot.slane %v136, %v140
    %v143 = vld [vmem:[%s2] sm:$0x1]
    %v144 = vlaneseq
    %v145 = vshrl.u32 %v144, 7
    %v146 = vsub.s32 0, %v145
    %v147 = vrot.slane %v143, %v146
    %v148 = vmul.f32 %v134, %v147
    %v149 = vmul.f32 %v135, %v147
    %v150 = vadd.f32 %v141, %v148
    %v151 = vadd.f32 %v141, %v149
    %v152 = vld [vmem:[%s2 + $0x1] sm:$0x1]
    %v153 = vlaneseq
    %v154 = vshrl.u32 %v153, 7
    %v155 = vsub.s32 0, %v154
    %v156 = vrot.slane %v152, %v155
    %v157 = vmul.f32 %v134, %v156
    %v158 = vmul.f32 %v129, %v156
    %v159 = vmul.f32 %v135, %v156
    %v160 = vmul.f32 %v130, %v156
    %vm165 = vcmask 1046528
    %v166 = vrot.slane %v157, 1
    %v167 = vrot.slane %v158, 1
    %v168 = vsel %vm165, %v166, %v167
    %v169 = vrot.slane %v159, 1
    %v170 = vrot.slane %v160, 1
    %v171 = vsel %vm165, %v169, %v170
    %v174 = vadd.f32 %v150, %v168
    %v175 = vadd.f32 %v151, %v171
    %v176 = vld [vmem:[%s2 + $0x2] sm:$0x1]
    %v177 = vlaneseq
    %v178 = vshrl.u32 %v177, 7
    %v179 = vsub.s32 0, %v178
    %v180 = vrot.slane %v176, %v179
    %v181 = vmul.f32 %v134, %v180
    %v182 = vmul.f32 %v129, %v180
    %v183 = vmul.f32 %v135, %v180
    %v184 = vmul.f32 %v130, %v180
    %vm189 = vcmask 1045504
    %v190 = vrot.slane %v181, 2
    %v191 = vrot.slane %v182, 2
    %v192 = vsel %vm189, %v190, %v191
    %v193 = vrot.slane %v183, 2
    %v194 = vrot.slane %v184, 2
    %v195 = vsel %vm189, %v193, %v194
    %v198 = vadd.f32 %v174, %v192
    %v199 = vadd.f32 %v175, %v195
    %v200 = vld [vmem:[%s2 + $0x3] sm:$0x1]
    %v201 = vlaneseq
    %v202 = vshrl.u32 %v201, 7
    %v203 = vsub.s32 0, %v202
    %v204 = vrot.slane %v200, %v203
    %v205 = vmul.f32 %v134, %v204
    %v206 = vmul.f32 %v129, %v204
    %v207 = vmul.f32 %v135, %v204
    %v208 = vmul.f32 %v130, %v204
    %vm213 = vcmask 1044480
    %v214 = vrot.slane %v205, 3
    %v215 = vrot.slane %v206, 3
    %v216 = vsel %vm213, %v214, %v215
    %v217 = vrot.slane %v207, 3
    %v218 = vrot.slane %v208, 3
    %v219 = vsel %vm213, %v217, %v218
    %v222 = vadd.f32 %v198, %v216
    %v223 = vadd.f32 %v199, %v219
    %v224 = vsub.f32 0.0, %v222
    %v225 = vsub.f32 0.0, %v223
    %v226 = vmul.f32 %v224, 1.442695
    %v227 = vpow.pop %v226
    %v228 = vmul.f32 %v225, 1.442695
    %v229 = vpow.pop %v228
    %v230 = vadd.f32 %v227, 1.0
    %v231 = vadd.f32 %v229, 1.0
    %v232 = vrcp.pop %v230
    %v233 = vmul.f32 1.0, %v232
    %v234 = vrcp.pop %v231
    %v235 = vmul.f32 1.0, %v234
    %v236 = vmul.f32 %v222, %v233
    %v237 = vmul.f32 %v223, %v235
    %v238 = vld [vmem:[%s4] sm:$0xff]
    %v239 = vld [vmem:[%s4 + $0x8] sm:$0xff]
    %vm240 = vcmask 130048
    %v242 = vsel %vm240, %v236, 0
    %v245 = vsel %vm240, %v237, 0
    %247 = vmatprep.subr.mxu0 0.0
    %248 = vmatpush1.msra.mxu0 %v238
    %249 = vmatprep.subr.mxu0 0.0
    %250 = vmatpush1.msra.mxu0 %v239
    %251 = vmatprep.subr.mxu0 0.0
    %252 = vmatpush1.msra.mxu0 0.0
    %253 = vmatprep.subr.mxu0 0.0
    %254 = vmatpush1.msra.mxu0 0.0
    %255 = vmatprep.subr.mxu0 0.0
    %256 = vmatpush1.msra.mxu0 0.0
    %257 = vmatprep.subr.mxu0 0.0
    %258 = vmatpush1.msra.mxu0 0.0
    %259 = vmatprep.subr.mxu0 0.0
    %260 = vmatpush1.msra.mxu0 0.0
    %261 = vmatprep.subr.mxu0 0.0
    %262 = vmatpush1.msra.mxu0 0.0
    %263 = vmatprep.subr.mxu0 0.0
    %264 = vmatpush1.msra.mxu0 0.0
    %265 = vmatprep.subr.mxu0 0.0
    %266 = vmatpush1.msra.mxu0 0.0
    %267 = vmatprep.subr.mxu0 0.0
    %268 = vmatpush1.msra.mxu0 0.0
    %269 = vmatprep.subr.mxu0 0.0
    %270 = vmatpush1.msra.mxu0 0.0
    %271 = vmatprep.subr.mxu0 0.0
    %272 = vmatpush1.msra.mxu0 0.0
    %273 = vmatprep.subr.mxu0 0.0
    %274 = vmatpush1.msra.mxu0 0.0
    %275 = vmatprep.subr.mxu0 0.0
    %276 = vmatpush1.msra.mxu0 0.0
    %277 = vmatprep.subr.mxu0 0.0
    %278 = vmatpush1.msra.mxu0 0.0
    %279 = vmatprep.subr.mxu0 0.0
    %280 = vmatpush1.msra.mxu0 0.0
    %281 = vmatprep.subr.mxu0 0.0
    %282 = vmatpush1.msra.mxu0 0.0
    %283 = vmatprep.subr.mxu0 0.0
    %284 = vmatpush1.msra.mxu0 0.0
    %285 = vmatprep.subr.mxu0 0.0
    %286 = vmatpush1.msra.mxu0 0.0
    %287 = vmatprep.subr.mxu0 0.0
    %288 = vmatpush1.msra.mxu0 0.0
    %289 = vmatprep.subr.mxu0 0.0
    %290 = vmatpush1.msra.mxu0 0.0
    %291 = vmatprep.subr.mxu0 0.0
    %292 = vmatpush1.msra.mxu0 0.0
    %293 = vmatprep.subr.mxu0 0.0
    %294 = vmatpush1.msra.mxu0 0.0
    %295 = vmatprep.subr.mxu0 0.0
    %296 = vmatpush1.msra.mxu0 0.0
    %297 = vmatprep.subr.mxu0 0.0
    %298 = vmatpush1.msra.mxu0 0.0
    %299 = vmatprep.subr.mxu0 0.0
    %300 = vmatpush1.msra.mxu0 0.0
    %301 = vmatprep.subr.mxu0 0.0
    %302 = vmatpush1.msra.mxu0 0.0
    %303 = vmatprep.subr.mxu0 0.0
    %304 = vmatpush1.msra.mxu0 0.0
    %305 = vmatprep.subr.mxu0 0.0
    %306 = vmatpush1.msra.mxu0 0.0
    %307 = vmatprep.subr.mxu0 0.0
    %308 = vmatpush1.msra.mxu0 0.0
    %309 = vmatprep.subr.mxu0 0.0
    %310 = vmatpush1.msra.mxu0 0.0
    %311 = vmatprep.mubr.f32.mxu0 0.0
    %312 = vmatmul.mubr.f32.gmra.mrb[0].mxu0 %v242
    %v313 = vpop.f32.mrb[0].mxu0
    %v314 = vadd.f32 0.0, %v313
    %v315 = vpop.f32.mrb[0].mxu0
    %316 = vmatprep.mubr.f32.mxu0 0.0
    %317 = vmatmul.mubr.f32.gmra.mrb[0].mxu0 %v245
    %v318 = vpop.f32.mrb[0].mxu0
    %v319 = vadd.f32 0.0, %v318
    %v320 = vpop.f32.mrb[0].mxu0
    %321 = vdwg.mxu0
    %v322 = vld [vmem:[%s5] sm:$0x1]
    %324 = vset.pattern.permute.xlu0 0
    %325 = vperm.xlu0 %324, %v314
    %v326 = vpop.permute.xlu0 %325
    %329 = vset.pattern.permute.xlu0 0
    %330 = vperm.xlu0 %329, %v319
    %v331 = vpop.permute.xlu0 %330
    %v334 = vlaneseq
    %v335 = vshrl.u32 %v334, 7
    %v336 = vsub.s32 0, %v335
    %v337 = vrot.slane %v322, %v336
    %v339 = vmul.f32 %v326, %v337
    %v340 = vmul.f32 %v331, %v337
    %v341 = vld [vmem:[%s6] sm:$0x1]
    %v343 = vlaneseq
    %v344 = vshrl.u32 %v343, 7
    %v345 = vsub.s32 0, %v344
    %v346 = vrot.slane %v341, %v345
    %v348 = vadd.f32 %v339, %v346
    %v349 = vadd.f32 %v340, %v346
    %vm350 = vcmp.gt.f32.partialorder %v348, 20.0
    %vm351 = vcmp.gt.f32.partialorder %v349, 20.0
    %v352 = vmin.f32 %v348, 20.0
    %v353 = vmin.f32 %v349, 20.0
    %v354 = vmul.f32 %v352, 1.442695
    %v355 = vpow.pop %v354
    %v356 = vmul.f32 %v353, 1.442695
    %v357 = vpow.pop %v356
    %v358 = vadd.f32 %v355, 1.0
    %v359 = vadd.f32 %v357, 1.0
    %v360 = vlog2.pop %v358
    %v361 = vmul.f32 %v360, 0.6931472
    %v362 = vlog2.pop %v359
    %v363 = vmul.f32 %v362, 0.6931472
    %v364 = vsel %vm350, %v348, %v361
    %v365 = vsel %vm351, %v349, %v363
    %366 = vrot.lane.b32.xlu0 %v314, 127
    %v367 = vpop.permute.xlu0 %366
    %368 = vrot.lane.b32.xlu0 %v319, 127
    %v369 = vpop.permute.xlu0 %368
    %372 = vxpose.xlu0.b32.start [1/16] %v367, 128
    %373 = vxpose.xlu0.b32.cont [2/16] 0.0, 128
    %374 = vxpose.xlu0.b32.cont [3/16] 0.0, 128
    %375 = vxpose.xlu0.b32.cont [4/16] 0.0, 128
    %376 = vxpose.xlu0.b32.cont [5/16] 0.0, 128
    %377 = vxpose.xlu0.b32.cont [6/16] 0.0, 128
    %378 = vxpose.xlu0.b32.cont [7/16] 0.0, 128
    %379 = vxpose.xlu0.b32.cont [8/16] 0.0, 128
    %380 = vxpose.xlu0.b32.cont [9/16] 0.0, 128
    %381 = vxpose.xlu0.b32.cont [10/16] 0.0, 128
    %382 = vxpose.xlu0.b32.cont [11/16] 0.0, 128
    %383 = vxpose.xlu0.b32.cont [12/16] 0.0, 128
    %384 = vxpose.xlu0.b32.cont [13/16] 0.0, 128
    %385 = vxpose.xlu0.b32.cont [14/16] 0.0, 128
    %386 = vxpose.xlu0.b32.cont [15/16] 0.0, 128
    %387 = vxpose.xlu0.b32.end [16/16] 0.0, 128
    %v388 = vpop.trf.xlu0
    %v389 = vpop.trf.xlu0
    %v390 = vpop.trf.xlu0
    %v391 = vpop.trf.xlu0
    %v392 = vpop.trf.xlu0
    %v393 = vpop.trf.xlu0
    %v394 = vpop.trf.xlu0
    %v395 = vpop.trf.xlu0
    %v396 = vpop.trf.xlu0
    %v397 = vpop.trf.xlu0
    %v398 = vpop.trf.xlu0
    %v399 = vpop.trf.xlu0
    %v400 = vpop.trf.xlu0
    %v401 = vpop.trf.xlu0
    %v402 = vpop.trf.xlu0
    %v403 = vpop.trf.xlu0
    %404 = vxpose.xlu0.b32.start [1/16] %v369, 128
    %405 = vxpose.xlu0.b32.cont [2/16] 0.0, 128
    %406 = vxpose.xlu0.b32.cont [3/16] 0.0, 128
    %407 = vxpose.xlu0.b32.cont [4/16] 0.0, 128
    %408 = vxpose.xlu0.b32.cont [5/16] 0.0, 128
    %409 = vxpose.xlu0.b32.cont [6/16] 0.0, 128
    %410 = vxpose.xlu0.b32.cont [7/16] 0.0, 128
    %411 = vxpose.xlu0.b32.cont [8/16] 0.0, 128
    %412 = vxpose.xlu0.b32.cont [9/16] 0.0, 128
    %413 = vxpose.xlu0.b32.cont [10/16] 0.0, 128
    %414 = vxpose.xlu0.b32.cont [11/16] 0.0, 128
    %415 = vxpose.xlu0.b32.cont [12/16] 0.0, 128
    %416 = vxpose.xlu0.b32.cont [13/16] 0.0, 128
    %417 = vxpose.xlu0.b32.cont [14/16] 0.0, 128
    %418 = vxpose.xlu0.b32.cont [15/16] 0.0, 128
    %419 = vxpose.xlu0.b32.end [16/16] 0.0, 128
    %v420 = vpop.trf.xlu0
    %v421 = vpop.trf.xlu0
    %v422 = vpop.trf.xlu0
    %v423 = vpop.trf.xlu0
    %v424 = vpop.trf.xlu0
    %v425 = vpop.trf.xlu0
    %v426 = vpop.trf.xlu0
    %v427 = vpop.trf.xlu0
    %v428 = vpop.trf.xlu0
    %v429 = vpop.trf.xlu0
    %v430 = vpop.trf.xlu0
    %v431 = vpop.trf.xlu0
    %v432 = vpop.trf.xlu0
    %v433 = vpop.trf.xlu0
    %v434 = vpop.trf.xlu0
    %v435 = vpop.trf.xlu0
    %436 = vrot.lane.b32.xlu0 %v314, 123
    %v437 = vpop.permute.xlu0 %436
    %438 = vrot.lane.b32.xlu0 %v319, 123
    %v439 = vpop.permute.xlu0 %438
    %442 = vxpose.xlu0.b32.start [1/16] %v437, 128
    %443 = vxpose.xlu0.b32.cont [2/16] 0.0, 128
    %444 = vxpose.xlu0.b32.cont [3/16] 0.0, 128
    %445 = vxpose.xlu0.b32.cont [4/16] 0.0, 128
    %446 = vxpose.xlu0.b32.cont [5/16] 0.0, 128
    %447 = vxpose.xlu0.b32.cont [6/16] 0.0, 128
    %448 = vxpose.xlu0.b32.cont [7/16] 0.0, 128
    %449 = vxpose.xlu0.b32.cont [8/16] 0.0, 128
    %450 = vxpose.xlu0.b32.cont [9/16] 0.0, 128
    %451 = vxpose.xlu0.b32.cont [10/16] 0.0, 128
    %452 = vxpose.xlu0.b32.cont [11/16] 0.0, 128
    %453 = vxpose.xlu0.b32.cont [12/16] 0.0, 128
    %454 = vxpose.xlu0.b32.cont [13/16] 0.0, 128
    %455 = vxpose.xlu0.b32.cont [14/16] 0.0, 128
    %456 = vxpose.xlu0.b32.cont [15/16] 0.0, 128
    %457 = vxpose.xlu0.b32.end [16/16] 0.0, 128
    %v458 = vpop.trf.xlu0
    %v459 = vpop.trf.xlu0
    %v460 = vpop.trf.xlu0
    %v461 = vpop.trf.xlu0
    %v462 = vpop.trf.xlu0
    %v463 = vpop.trf.xlu0
    %v464 = vpop.trf.xlu0
    %v465 = vpop.trf.xlu0
    %v466 = vpop.trf.xlu0
    %v467 = vpop.trf.xlu0
    %v468 = vpop.trf.xlu0
    %v469 = vpop.trf.xlu0
    %v470 = vpop.trf.xlu0
    %v471 = vpop.trf.xlu0
    %v472 = vpop.trf.xlu0
    %v473 = vpop.trf.xlu0
    %474 = vxpose.xlu0.b32.start [1/16] %v439, 128
    %475 = vxpose.xlu0.b32.cont [2/16] 0.0, 128
    %476 = vxpose.xlu0.b32.cont [3/16] 0.0, 128
    %477 = vxpose.xlu0.b32.cont [4/16] 0.0, 128
    %478 = vxpose.xlu0.b32.cont [5/16] 0.0, 128
    %479 = vxpose.xlu0.b32.cont [6/16] 0.0, 128
    %480 = vxpose.xlu0.b32.cont [7/16] 0.0, 128
    %481 = vxpose.xlu0.b32.cont [8/16] 0.0, 128
    %482 = vxpose.xlu0.b32.cont [9/16] 0.0, 128
    %483 = vxpose.xlu0.b32.cont [10/16] 0.0, 128
    %484 = vxpose.xlu0.b32.cont [11/16] 0.0, 128
    %485 = vxpose.xlu0.b32.cont [12/16] 0.0, 128
    %486 = vxpose.xlu0.b32.cont [13/16] 0.0, 128
    %487 = vxpose.xlu0.b32.cont [14/16] 0.0, 128
    %488 = vxpose.xlu0.b32.cont [15/16] 0.0, 128
    %489 = vxpose.xlu0.b32.end [16/16] 0.0, 128
    %v490 = vpop.trf.xlu0
    %v491 = vpop.trf.xlu0
    %v492 = vpop.trf.xlu0
    %v493 = vpop.trf.xlu0
    %v494 = vpop.trf.xlu0
    %v495 = vpop.trf.xlu0
    %v496 = vpop.trf.xlu0
    %v497 = vpop.trf.xlu0
    %v498 = vpop.trf.xlu0
    %v499 = vpop.trf.xlu0
    %v500 = vpop.trf.xlu0
    %v501 = vpop.trf.xlu0
    %v502 = vpop.trf.xlu0
    %v503 = vpop.trf.xlu0
    %v504 = vpop.trf.xlu0
    %v505 = vpop.trf.xlu0
    %v508 = vcombine.high %v364, %v364
    %v510 = vunpack.c.l.s4 1966171168
    %v511 = vunpack.c.0.s8 %v510
    %v512 = vlaneseq
    %v513 = vshrl.u32 %v512, 7
    %v514 = vsub.s32 %v511, %v513
    %v515 = vrot.slane %v364, %v514
    %v517 = vunpack.c.l.s4 1966171168
    %v518 = vunpack.c.0.s8 %v517
    %v519 = vlaneseq
    %v520 = vshrl.u32 %v519, 7
    %v521 = vsub.s32 %v518, %v520
    %v522 = vrot.slane %v508, %v521
    %v523 = vcombine.high %v515, %v515
    %v524 = vcombine.high %v522, %v522
    %v526 = vunpack.c.l.s4 1966171168
    %v527 = vunpack.c.0.s8 %v526
    %v528 = vlaneseq
    %v529 = vshrl.u32 %v528, 7
    %v530 = vsub.s32 %v527, %v529
    %v531 = vrot.slane %v515, %v530
    %v533 = vunpack.c.l.s4 1966171168
    %v534 = vunpack.c.0.s8 %v533
    %v535 = vlaneseq
    %v536 = vshrl.u32 %v535, 7
    %v537 = vsub.s32 %v534, %v536
    %v538 = vrot.slane %v522, %v537
    %v540 = vunpack.c.l.s4 1966171168
    %v541 = vunpack.c.0.s8 %v540
    %v542 = vlaneseq
    %v543 = vshrl.u32 %v542, 7
    %v544 = vsub.s32 %v541, %v543
    %v545 = vrot.slane %v523, %v544
    %v547 = vunpack.c.l.s4 1966171168
    %v548 = vunpack.c.0.s8 %v547
    %v549 = vlaneseq
    %v550 = vshrl.u32 %v549, 7
    %v551 = vsub.s32 %v548, %v550
    %v552 = vrot.slane %v524, %v551
    %v553 = vcombine.high %v531, %v531
    %v554 = vcombine.high %v538, %v538
    %v555 = vcombine.high %v545, %v545
    %v556 = vcombine.high %v552, %v552
    %v557 = vcombine.high %v365, %v365
    %v559 = vunpack.c.l.s4 1966171168
    %v560 = vunpack.c.0.s8 %v559
    %v561 = vlaneseq
    %v562 = vshrl.u32 %v561, 7
    %v563 = vsub.s32 %v560, %v562
    %v564 = vrot.slane %v365, %v563
    %v566 = vunpack.c.l.s4 1966171168
    %v567 = vunpack.c.0.s8 %v566
    %v568 = vlaneseq
    %v569 = vshrl.u32 %v568, 7
    %v570 = vsub.s32 %v567, %v569
    %v571 = vrot.slane %v557, %v570
    %v572 = vcombine.high %v564, %v564
    %v573 = vcombine.high %v571, %v571
    %v575 = vunpack.c.l.s4 1966171168
    %v576 = vunpack.c.0.s8 %v575
    %v577 = vlaneseq
    %v578 = vshrl.u32 %v577, 7
    %v579 = vsub.s32 %v576, %v578
    %v580 = vrot.slane %v564, %v579
    %v582 = vunpack.c.l.s4 1966171168
    %v583 = vunpack.c.0.s8 %v582
    %v584 = vlaneseq
    %v585 = vshrl.u32 %v584, 7
    %v586 = vsub.s32 %v583, %v585
    %v587 = vrot.slane %v571, %v586
    %v589 = vunpack.c.l.s4 1966171168
    %v590 = vunpack.c.0.s8 %v589
    %v591 = vlaneseq
    %v592 = vshrl.u32 %v591, 7
    %v593 = vsub.s32 %v590, %v592
    %v594 = vrot.slane %v572, %v593
    %v596 = vunpack.c.l.s4 1966171168
    %v597 = vunpack.c.0.s8 %v596
    %v598 = vlaneseq
    %v599 = vshrl.u32 %v598, 7
    %v600 = vsub.s32 %v597, %v599
    %v601 = vrot.slane %v573, %v600
    %v602 = vcombine.high %v580, %v580
    %v603 = vcombine.high %v587, %v587
    %v604 = vcombine.high %v594, %v594
    %v605 = vcombine.high %v601, %v601
    %v606 = vld [vmem:[%s7] sm:$0xf]
    %v607 = vlaneseq
    %v608 = vshrl.u32 %v607, 7
    %v609 = vsub.s32 0, %v608
    %v610 = vrot.slane %v531, %v609
    %v611 = vlaneseq
    %v612 = vshrl.u32 %v611, 7
    %v613 = vsub.s32 0, %v612
    %v614 = vrot.slane %v545, %v613
    %v615 = vlaneseq
    %v616 = vshrl.u32 %v615, 7
    %v617 = vsub.s32 0, %v616
    %v618 = vrot.slane %v553, %v617
    %v619 = vlaneseq
    %v620 = vshrl.u32 %v619, 7
    %v621 = vsub.s32 0, %v620
    %v622 = vrot.slane %v555, %v621
    %v623 = vlaneseq
    %v624 = vshrl.u32 %v623, 7
    %v625 = vsub.s32 0, %v624
    %v626 = vrot.slane %v538, %v625
    %v627 = vlaneseq
    %v628 = vshrl.u32 %v627, 7
    %v629 = vsub.s32 0, %v628
    %v630 = vrot.slane %v552, %v629
    %v631 = vlaneseq
    %v632 = vshrl.u32 %v631, 7
    %v633 = vsub.s32 0, %v632
    %v634 = vrot.slane %v554, %v633
    %v635 = vlaneseq
    %v636 = vshrl.u32 %v635, 7
    %v637 = vsub.s32 0, %v636
    %v638 = vrot.slane %v556, %v637
    %v639 = vlaneseq
    %v640 = vshrl.u32 %v639, 7
    %v641 = vsub.s32 0, %v640
    %v642 = vrot.slane %v580, %v641
    %v643 = vlaneseq
    %v644 = vshrl.u32 %v643, 7
    %v645 = vsub.s32 0, %v644
    %v646 = vrot.slane %v594, %v645
    %v647 = vlaneseq
    %v648 = vshrl.u32 %v647, 7
    %v649 = vsub.s32 0, %v648
    %v650 = vrot.slane %v602, %v649
    %v651 = vlaneseq
    %v652 = vshrl.u32 %v651, 7
    %v653 = vsub.s32 0, %v652
    %v654 = vrot.slane %v604, %v653
    %v655 = vlaneseq
    %v656 = vshrl.u32 %v655, 7
    %v657 = vsub.s32 0, %v656
    %v658 = vrot.slane %v587, %v657
    %v659 = vlaneseq
    %v660 = vshrl.u32 %v659, 7
    %v661 = vsub.s32 0, %v660
    %v662 = vrot.slane %v601, %v661
    %v663 = vlaneseq
    %v664 = vshrl.u32 %v663, 7
    %v665 = vsub.s32 0, %v664
    %v666 = vrot.slane %v603, %v665
    %v667 = vlaneseq
    %v668 = vshrl.u32 %v667, 7
    %v669 = vsub.s32 0, %v668
    %v670 = vrot.slane %v605, %v669
    %v687 = vmul.f32 %v610, %v606
    %v688 = vmul.f32 %v614, %v606
    %v689 = vmul.f32 %v618, %v606
    %v690 = vmul.f32 %v622, %v606
    %v691 = vmul.f32 %v626, %v606
    %v692 = vmul.f32 %v630, %v606
    %v693 = vmul.f32 %v634, %v606
    %v694 = vmul.f32 %v638, %v606
    %v695 = vmul.f32 %v642, %v606
    %v696 = vmul.f32 %v646, %v606
    %v697 = vmul.f32 %v650, %v606
    %v698 = vmul.f32 %v654, %v606
    %v699 = vmul.f32 %v658, %v606
    %v700 = vmul.f32 %v662, %v606
    %v701 = vmul.f32 %v666, %v606
    %v702 = vmul.f32 %v670, %v606
    %v703 = vmul.f32 %v687, 1.442695
    %v704 = vpow.pop %v703
    %v705 = vmul.f32 %v688, 1.442695
    %v706 = vpow.pop %v705
    %v707 = vmul.f32 %v689, 1.442695
    %v708 = vpow.pop %v707
    %v709 = vmul.f32 %v690, 1.442695
    %v710 = vpow.pop %v709
    %v711 = vmul.f32 %v691, 1.442695
    %v712 = vpow.pop %v711
    %v713 = vmul.f32 %v692, 1.442695
    %v714 = vpow.pop %v713
    %v715 = vmul.f32 %v693, 1.442695
    %v716 = vpow.pop %v715
    %v717 = vmul.f32 %v694, 1.442695
    %v718 = vpow.pop %v717
    %v719 = vmul.f32 %v695, 1.442695
    %v720 = vpow.pop %v719
    %v721 = vmul.f32 %v696, 1.442695
    %v722 = vpow.pop %v721
    %v723 = vmul.f32 %v697, 1.442695
    %v724 = vpow.pop %v723
    %v725 = vmul.f32 %v698, 1.442695
    %v726 = vpow.pop %v725
    %v727 = vmul.f32 %v699, 1.442695
    %v728 = vpow.pop %v727
    %v729 = vmul.f32 %v700, 1.442695
    %v730 = vpow.pop %v729
    %v731 = vmul.f32 %v701, 1.442695
    %v732 = vpow.pop %v731
    %v733 = vmul.f32 %v702, 1.442695
    %v734 = vpow.pop %v733
    %v735 = vmul.f32 %v364, %v236
    %v736 = vmul.f32 %v365, %v237
    %v737 = vmul.f32 %v704, 0.0
    %v738 = vmul.f32 %v720, 0.0
    %v739 = vlaneseq
    %v740 = vshrl.u32 %v739, 7
    %v741 = vsub.s32 0, %v740
    %v742 = vrot.slane %v735, %v741
    %v743 = vlaneseq
    %v744 = vshrl.u32 %v743, 7
    %v745 = vsub.s32 0, %v744
    %v746 = vrot.slane %v736, %v745
    %748 = vset.pattern.permute.xlu0 0
    %749 = vperm.xlu0 %748, %v388
    %v750 = vpop.permute.xlu0 %749
    %753 = vset.pattern.permute.xlu0 0
    %754 = vperm.xlu0 %753, %v420
    %v755 = vpop.permute.xlu0 %754
    %v757 = vmul.f32 %v742, %v750
    %v758 = vmul.f32 %v746, %v755
    %v759 = vadd.f32 %v737, %v757
    %v760 = vadd.f32 %v738, %v758
    %762 = vset.pattern.permute.xlu0 0
    %763 = vperm.xlu0 %762, %v458
    %v764 = vpop.permute.xlu0 %763
    %767 = vset.pattern.permute.xlu0 0
    %768 = vperm.xlu0 %767, %v490
    %v769 = vpop.permute.xlu0 %768
    %v771 = vmul.f32 %v759, %v764
    %v772 = vmul.f32 %v760, %v769
    %vm773 = vcmask 125952
    %v774 = vsel %vm773, %v771, 0.0
    %v775 = vrot.slane %v774, 4
    %v776 = vadd.f32 %v774, %v775
    %v777 = vrot.slane %v776, 2
    %v778 = vadd.f32 %v776, %v777
    %v779 = vrot.slane %v778, 1
    %v780 = vadd.f32 %v778, %v779
    %v781 = vsel %vm773, %v772, 0.0
    %v782 = vrot.slane %v781, 4
    %v783 = vadd.f32 %v781, %v782
    %v784 = vrot.slane %v783, 2
    %v785 = vadd.f32 %v783, %v784
    %v786 = vrot.slane %v785, 1
    %v787 = vadd.f32 %v785, %v786
    %vm788 = vcmask 122880
    %789 = vst.msk [vmem:[#allocation2] sm:$0x1] %vm788, %v780
    %790 = vst.msk [vmem:[#allocation2 + $0x8] sm:$0x1] %vm788, %v787
    %v791 = vmul.f32 %v706, %v759
    %v792 = vmul.f32 %v722, %v760
    %v793 = vlaneseq
    %v794 = vshrl.u32 %v793, 7
    %v795 = vsub.s32 1, %v794
    %v796 = vrot.slane %v735, %v795
    %v797 = vlaneseq
    %v798 = vshrl.u32 %v797, 7
    %v799 = vsub.s32 1, %v798
    %v800 = vrot.slane %v736, %v799
    %801 = vset.pattern.permute.xlu0 1
    %802 = vperm.xlu0 %801, %v388
    %v803 = vpop.permute.xlu0 %802
    %805 = vset.pattern.permute.xlu0 1
    %806 = vperm.xlu0 %805, %v420
    %v807 = vpop.permute.xlu0 %806
    %v809 = vmul.f32 %v796, %v803
    %v810 = vmul.f32 %v800, %v807
    %v811 = vadd.f32 %v791, %v809
    %v812 = vadd.f32 %v792, %v810
    %813 = vset.pattern.permute.xlu0 1
    %814 = vperm.xlu0 %813, %v458
    %v815 = vpop.permute.xlu0 %814
    %817 = vset.pattern.permute.xlu0 1
    %818 = vperm.xlu0 %817, %v490
    %v819 = vpop.permute.xlu0 %818
    %v821 = vmul.f32 %v811, %v815
    %v822 = vmul.f32 %v812, %v819
    %v823 = vsel %vm773, %v821, 0.0
    %v824 = vrot.slane %v823, 4
    %v825 = vadd.f32 %v823, %v824
    %v826 = vrot.slane %v825, 2
    %v827 = vadd.f32 %v825, %v826
    %v828 = vrot.slane %v827, 1
    %v829 = vadd.f32 %v827, %v828
    %v830 = vsel %vm773, %v822, 0.0
    %v831 = vrot.slane %v830, 4
    %v832 = vadd.f32 %v830, %v831
    %v833 = vrot.slane %v832, 2
    %v834 = vadd.f32 %v832, %v833
    %v835 = vrot.slane %v834, 1
    %v836 = vadd.f32 %v834, %v835
    %837 = vst.msk [vmem:[#allocation2 + $0x1] sm:$0x1] %vm788, %v829
    %838 = vst.msk [vmem:[#allocation2 + $0x9] sm:$0x1] %vm788, %v836
    %v839 = vmul.f32 %v708, %v811
    %v840 = vmul.f32 %v724, %v812
    %v841 = vlaneseq
    %v842 = vshrl.u32 %v841, 7
    %v843 = vsub.s32 2, %v842
    %v844 = vrot.slane %v735, %v843
    %v845 = vlaneseq
    %v846 = vshrl.u32 %v845, 7
    %v847 = vsub.s32 2, %v846
    %v848 = vrot.slane %v736, %v847
    %849 = vset.pattern.permute.xlu0 2
    %850 = vperm.xlu0 %849, %v388
    %v851 = vpop.permute.xlu0 %850
    %853 = vset.pattern.permute.xlu0 2
    %854 = vperm.xlu0 %853, %v420
    %v855 = vpop.permute.xlu0 %854
    %v857 = vmul.f32 %v844, %v851
    %v858 = vmul.f32 %v848, %v855
    %v859 = vadd.f32 %v839, %v857
    %v860 = vadd.f32 %v840, %v858
    %861 = vset.pattern.permute.xlu0 2
    %862 = vperm.xlu0 %861, %v458
    %v863 = vpop.permute.xlu0 %862
    %865 = vset.pattern.permute.xlu0 2
    %866 = vperm.xlu0 %865, %v490
    %v867 = vpop.permute.xlu0 %866
    %v869 = vmul.f32 %v859, %v863
    %v870 = vmul.f32 %v860, %v867
    %v871 = vsel %vm773, %v869, 0.0
    %v872 = vrot.slane %v871, 4
    %v873 = vadd.f32 %v871, %v872
    %v874 = vrot.slane %v873, 2
    %v875 = vadd.f32 %v873, %v874
    %v876 = vrot.slane %v875, 1
    %v877 = vadd.f32 %v875, %v876
    %v878 = vsel %vm773, %v870, 0.0
    %v879 = vrot.slane %v878, 4
    %v880 = vadd.f32 %v878, %v879
    %v881 = vrot.slane %v880, 2
    %v882 = vadd.f32 %v880, %v881
    %v883 = vrot.slane %v882, 1
    %v884 = vadd.f32 %v882, %v883
    %885 = vst.msk [vmem:[#allocation2 + $0x2] sm:$0x1] %vm788, %v877
    %886 = vst.msk [vmem:[#allocation2 + $0xa] sm:$0x1] %vm788, %v884
    %v887 = vmul.f32 %v710, %v859
    %v888 = vmul.f32 %v726, %v860
    %v889 = vlaneseq
    %v890 = vshrl.u32 %v889, 7
    %v891 = vsub.s32 3, %v890
    %v892 = vrot.slane %v735, %v891
    %v893 = vlaneseq
    %v894 = vshrl.u32 %v893, 7
    %v895 = vsub.s32 3, %v894
    %v896 = vrot.slane %v736, %v895
    %897 = vset.pattern.permute.xlu0 3
    %898 = vperm.xlu0 %897, %v388
    %v899 = vpop.permute.xlu0 %898
    %901 = vset.pattern.permute.xlu0 3
    %902 = vperm.xlu0 %901, %v420
    %v903 = vpop.permute.xlu0 %902
    %v905 = vmul.f32 %v892, %v899
    %v906 = vmul.f32 %v896, %v903
    %v907 = vadd.f32 %v887, %v905
    %v908 = vadd.f32 %v888, %v906
    %909 = vset.pattern.permute.xlu0 3
    %910 = vperm.xlu0 %909, %v458
    %v911 = vpop.permute.xlu0 %910
    %913 = vset.pattern.permute.xlu0 3
    %914 = vperm.xlu0 %913, %v490
    %v915 = vpop.permute.xlu0 %914
    %v917 = vmul.f32 %v907, %v911
    %v918 = vmul.f32 %v908, %v915
    %v919 = vsel %vm773, %v917, 0.0
    %v920 = vrot.slane %v919, 4
    %v921 = vadd.f32 %v919, %v920
    %v922 = vrot.slane %v921, 2
    %v923 = vadd.f32 %v921, %v922
    %v924 = vrot.slane %v923, 1
    %v925 = vadd.f32 %v923, %v924
    %v926 = vsel %vm773, %v918, 0.0
    %v927 = vrot.slane %v926, 4
    %v928 = vadd.f32 %v926, %v927
    %v929 = vrot.slane %v928, 2
    %v930 = vadd.f32 %v928, %v929
    %v931 = vrot.slane %v930, 1
    %v932 = vadd.f32 %v930, %v931
    %933 = vst.msk [vmem:[#allocation2 + $0x3] sm:$0x1] %vm788, %v925
    %934 = vst.msk [vmem:[#allocation2 + $0xb] sm:$0x1] %vm788, %v932
    %v935 = vmul.f32 %v712, %v907
    %v936 = vmul.f32 %v728, %v908
    %v937 = vlaneseq
    %v938 = vshrl.u32 %v937, 7
    %v939 = vsub.s32 4, %v938
    %v940 = vrot.slane %v735, %v939
    %v941 = vlaneseq
    %v942 = vshrl.u32 %v941, 7
    %v943 = vsub.s32 4, %v942
    %v944 = vrot.slane %v736, %v943
    %945 = vset.pattern.permute.xlu0 4
    %946 = vperm.xlu0 %945, %v388
    %v947 = vpop.permute.xlu0 %946
    %949 = vset.pattern.permute.xlu0 4
    %950 = vperm.xlu0 %949, %v420
    %v951 = vpop.permute.xlu0 %950
    %v953 = vmul.f32 %v940, %v947
    %v954 = vmul.f32 %v944, %v951
    %v955 = vadd.f32 %v935, %v953
    %v956 = vadd.f32 %v936, %v954
    %957 = vset.pattern.permute.xlu0 4
    %958 = vperm.xlu0 %957, %v458
    %v959 = vpop.permute.xlu0 %958
    %961 = vset.pattern.permute.xlu0 4
    %962 = vperm.xlu0 %961, %v490
    %v963 = vpop.permute.xlu0 %962
    %v965 = vmul.f32 %v955, %v959
    %v966 = vmul.f32 %v956, %v963
    %v967 = vsel %vm773, %v965, 0.0
    %v968 = vrot.slane %v967, 4
    %v969 = vadd.f32 %v967, %v968
    %v970 = vrot.slane %v969, 2
    %v971 = vadd.f32 %v969, %v970
    %v972 = vrot.slane %v971, 1
    %v973 = vadd.f32 %v971, %v972
    %v974 = vsel %vm773, %v966, 0.0
    %v975 = vrot.slane %v974, 4
    %v976 = vadd.f32 %v974, %v975
    %v977 = vrot.slane %v976, 2
    %v978 = vadd.f32 %v976, %v977
    %v979 = vrot.slane %v978, 1
    %v980 = vadd.f32 %v978, %v979
    %981 = vst.msk [vmem:[#allocation2 + $0x4] sm:$0x1] %vm788, %v973
    %982 = vst.msk [vmem:[#allocation2 + $0xc] sm:$0x1] %vm788, %v980
    %v983 = vmul.f32 %v714, %v955
    %v984 = vmul.f32 %v730, %v956
    %v985 = vlaneseq
    %v986 = vshrl.u32 %v985, 7
    %v987 = vsub.s32 5, %v986
    %v988 = vrot.slane %v735, %v987
    %v989 = vlaneseq
    %v990 = vshrl.u32 %v989, 7
    %v991 = vsub.s32 5, %v990
    %v992 = vrot.slane %v736, %v991
    %993 = vset.pattern.permute.xlu0 5
    %994 = vperm.xlu0 %993, %v388
    %v995 = vpop.permute.xlu0 %994
    %997 = vset.pattern.permute.xlu0 5
    %998 = vperm.xlu0 %997, %v420
    %v999 = vpop.permute.xlu0 %998
    %v1001 = vmul.f32 %v988, %v995
    %v1002 = vmul.f32 %v992, %v999
    %v1003 = vadd.f32 %v983, %v1001
    %v1004 = vadd.f32 %v984, %v1002
    %1005 = vset.pattern.permute.xlu0 5
    %1006 = vperm.xlu0 %1005, %v458
    %v1007 = vpop.permute.xlu0 %1006
    %1009 = vset.pattern.permute.xlu0 5
    %1010 = vperm.xlu0 %1009, %v490
    %v1011 = vpop.permute.xlu0 %1010
    %v1013 = vmul.f32 %v1003, %v1007
    %v1014 = vmul.f32 %v1004, %v1011
    %v1015 = vsel %vm773, %v1013, 0.0
    %v1016 = vrot.slane %v1015, 4
    %v1017 = vadd.f32 %v1015, %v1016
    %v1018 = vrot.slane %v1017, 2
    %v1019 = vadd.f32 %v1017, %v1018
    %v1020 = vrot.slane %v1019, 1
    %v1021 = vadd.f32 %v1019, %v1020
    %v1022 = vsel %vm773, %v1014, 0.0
    %v1023 = vrot.slane %v1022, 4
    %v1024 = vadd.f32 %v1022, %v1023
    %v1025 = vrot.slane %v1024, 2
    %v1026 = vadd.f32 %v1024, %v1025
    %v1027 = vrot.slane %v1026, 1
    %v1028 = vadd.f32 %v1026, %v1027
    %1029 = vst.msk [vmem:[#allocation2 + $0x5] sm:$0x1] %vm788, %v1021
    %1030 = vst.msk [vmem:[#allocation2 + $0xd] sm:$0x1] %vm788, %v1028
    %v1031 = vmul.f32 %v716, %v1003
    %v1032 = vmul.f32 %v732, %v1004
    %v1033 = vlaneseq
    %v1034 = vshrl.u32 %v1033, 7
    %v1035 = vsub.s32 6, %v1034
    %v1036 = vrot.slane %v735, %v1035
    %v1037 = vlaneseq
    %v1038 = vshrl.u32 %v1037, 7
    %v1039 = vsub.s32 6, %v1038
    %v1040 = vrot.slane %v736, %v1039
    %1041 = vset.pattern.permute.xlu0 6
    %1042 = vperm.xlu0 %1041, %v388
    %v1043 = vpop.permute.xlu0 %1042
    %1045 = vset.pattern.permute.xlu0 6
    %1046 = vperm.xlu0 %1045, %v420
    %v1047 = vpop.permute.xlu0 %1046
    %v1049 = vmul.f32 %v1036, %v1043
    %v1050 = vmul.f32 %v1040, %v1047
    %v1051 = vadd.f32 %v1031, %v1049
    %v1052 = vadd.f32 %v1032, %v1050
    %1053 = vset.pattern.permute.xlu0 6
    %1054 = vperm.xlu0 %1053, %v458
    %v1055 = vpop.permute.xlu0 %1054
    %1057 = vset.pattern.permute.xlu0 6
    %1058 = vperm.xlu0 %1057, %v490
    %v1059 = vpop.permute.xlu0 %1058
    %v1061 = vmul.f32 %v1051, %v1055
    %v1062 = vmul.f32 %v1052, %v1059
    %v1063 = vsel %vm773, %v1061, 0.0
    %v1064 = vrot.slane %v1063, 4
    %v1065 = vadd.f32 %v1063, %v1064
    %v1066 = vrot.slane %v1065, 2
    %v1067 = vadd.f32 %v1065, %v1066
    %v1068 = vrot.slane %v1067, 1
    %v1069 = vadd.f32 %v1067, %v1068
    %v1070 = vsel %vm773, %v1062, 0.0
    %v1071 = vrot.slane %v1070, 4
    %v1072 = vadd.f32 %v1070, %v1071
    %v1073 = vrot.slane %v1072, 2
    %v1074 = vadd.f32 %v1072, %v1073
    %v1075 = vrot.slane %v1074, 1
    %v1076 = vadd.f32 %v1074, %v1075
    %1077 = vst.msk [vmem:[#allocation2 + $0x6] sm:$0x1] %vm788, %v1069
    %1078 = vst.msk [vmem:[#allocation2 + $0xe] sm:$0x1] %vm788, %v1076
    %v1079 = vmul.f32 %v718, %v1051
    %v1080 = vmul.f32 %v734, %v1052
    %v1081 = vlaneseq
    %v1082 = vshrl.u32 %v1081, 7
    %v1083 = vsub.s32 7, %v1082
    %v1084 = vrot.slane %v735, %v1083
    %v1085 = vlaneseq
    %v1086 = vshrl.u32 %v1085, 7
    %v1087 = vsub.s32 7, %v1086
    %v1088 = vrot.slane %v736, %v1087
    %1089 = vset.pattern.permute.xlu0 7
    %1090 = vperm.xlu0 %1089, %v388
    %v1091 = vpop.permute.xlu0 %1090
    %1093 = vset.pattern.permute.xlu0 7
    %1094 = vperm.xlu0 %1093, %v420
    %v1095 = vpop.permute.xlu0 %1094
    %v1097 = vmul.f32 %v1084, %v1091
    %v1098 = vmul.f32 %v1088, %v1095
    %v1099 = vadd.f32 %v1079, %v1097
    %v1100 = vadd.f32 %v1080, %v1098
    %1101 = vset.pattern.permute.xlu0 7
    %1102 = vperm.xlu0 %1101, %v458
    %v1103 = vpop.permute.xlu0 %1102
    %1105 = vset.pattern.permute.xlu0 7
    %1106 = vperm.xlu0 %1105, %v490
    %v1107 = vpop.permute.xlu0 %1106
    %v1109 = vmul.f32 %v1099, %v1103
    %v1110 = vmul.f32 %v1100, %v1107
    %v1111 = vsel %vm773, %v1109, 0.0
    %v1112 = vrot.slane %v1111, 4
    %v1113 = vadd.f32 %v1111, %v1112
    %v1114 = vrot.slane %v1113, 2
    %v1115 = vadd.f32 %v1113, %v1114
    %v1116 = vrot.slane %v1115, 1
    %v1117 = vadd.f32 %v1115, %v1116
    %v1118 = vsel %vm773, %v1110, 0.0
    %v1119 = vrot.slane %v1118, 4
    %v1120 = vadd.f32 %v1118, %v1119
    %v1121 = vrot.slane %v1120, 2
    %v1122 = vadd.f32 %v1120, %v1121
    %v1123 = vrot.slane %v1122, 1
    %v1124 = vadd.f32 %v1122, %v1123
    %1125 = vst.msk [vmem:[#allocation2 + $0x7] sm:$0x1] %vm788, %v1117
    %1126 = vst.msk [vmem:[#allocation2 + $0xf] sm:$0x1] %vm788, %v1124
    %v1127 = vld [vmem:[#allocation2] sm:$0xff]
    %v1128 = vld [vmem:[#allocation2 + $0x8] sm:$0xff]
    %v1129 = vld [vmem:[%s8] sm:$0x1]
    %v1131 = vlaneseq
    %v1132 = vshrl.u32 %v1131, 7
    %v1133 = vsub.s32 0, %v1132
    %v1134 = vrot.slane %v1129, %v1133
    %v1136 = vmul.f32 %v1134, %v236
    %v1137 = vmul.f32 %v1134, %v237
    %v1138 = vadd.f32 %v1127, %v1136
    %v1139 = vadd.f32 %v1128, %v1137
    %v1140 = vsub.f32 0.0, %v119
    %v1141 = vsub.f32 0.0, %v124
    %v1142 = vmul.f32 %v1140, 1.442695
    %v1143 = vpow.pop %v1142
    %v1144 = vmul.f32 %v1141, 1.442695
    %v1145 = vpow.pop %v1144
    %v1146 = vadd.f32 %v1143, 1.0
    %v1147 = vadd.f32 %v1145, 1.0
    %v1148 = vrcp.pop %v1146
    %v1149 = vmul.f32 1.0, %v1148
    %v1150 = vrcp.pop %v1147
    %v1151 = vmul.f32 1.0, %v1150
    %v1152 = vmul.f32 %v119, %v1149
    %v1153 = vmul.f32 %v124, %v1151
    %1156 = vrot.lane.b32.xlu0 %v1152, 112
    %v1157 = vpop.permute.xlu0 %1156
    %1158 = vrot.lane.b32.xlu0 %v1153, 112
    %v1159 = vpop.permute.xlu0 %1158
    %v1162 = vmul.f32 %v1138, %v1157
    %v1163 = vmul.f32 %v1139, %v1159
    %v1164 = vld [vmem:[%s9] sm:$0xff]
    %v1165 = vld [vmem:[%s9 + $0x8] sm:$0xff]
    %v1167 = vsel %vm240, %v1162, 0
    %v1170 = vsel %vm240, %v1163, 0
    %1172 = vmatprep.subr.mxu0 0.0
    %1173 = vmatpush1.msra.mxu0 %v1164
    %1174 = vmatprep.subr.mxu0 0.0
    %1175 = vmatpush1.msra.mxu0 %v1165
    %1176 = vmatprep.subr.mxu0 0.0
    %1177 = vmatpush1.msra.mxu0 0.0
    %1178 = vmatprep.subr.mxu0 0.0
    %1179 = vmatpush1.msra.mxu0 0.0
    %1180 = vmatprep.subr.mxu0 0.0
    %1181 = vmatpush1.msra.mxu0 0.0
    %1182 = vmatprep.subr.mxu0 0.0
    %1183 = vmatpush1.msra.mxu0 0.0
    %1184 = vmatprep.subr.mxu0 0.0
    %1185 = vmatpush1.msra.mxu0 0.0
    %1186 = vmatprep.subr.mxu0 0.0
    %1187 = vmatpush1.msra.mxu0 0.0
    %1188 = vmatprep.subr.mxu0 0.0
    %1189 = vmatpush1.msra.mxu0 0.0
    %1190 = vmatprep.subr.mxu0 0.0
    %1191 = vmatpush1.msra.mxu0 0.0
    %1192 = vmatprep.subr.mxu0 0.0
    %1193 = vmatpush1.msra.mxu0 0.0
    %1194 = vmatprep.subr.mxu0 0.0
    %1195 = vmatpush1.msra.mxu0 0.0
    %1196 = vmatprep.subr.mxu0 0.0
    %1197 = vmatpush1.msra.mxu0 0.0
    %1198 = vmatprep.subr.mxu0 0.0
    %1199 = vmatpush1.msra.mxu0 0.0
    %1200 = vmatprep.subr.mxu0 0.0
    %1201 = vmatpush1.msra.mxu0 0.0
    %1202 = vmatprep.subr.mxu0 0.0
    %1203 = vmatpush1.msra.mxu0 0.0
    %1204 = vmatprep.subr.mxu0 0.0
    %1205 = vmatpush1.msra.mxu0 0.0
    %1206 = vmatprep.subr.mxu0 0.0
    %1207 = vmatpush1.msra.mxu0 0.0
    %1208 = vmatprep.subr.mxu0 0.0
    %1209 = vmatpush1.msra.mxu0 0.0
    %1210 = vmatprep.subr.mxu0 0.0
    %1211 = vmatpush1.msra.mxu0 0.0
    %1212 = vmatprep.subr.mxu0 0.0
    %1213 = vmatpush1.msra.mxu0 0.0
    %1214 = vmatprep.subr.mxu0 0.0
    %1215 = vmatpush1.msra.mxu0 0.0
    %1216 = vmatprep.subr.mxu0 0.0
    %1217 = vmatpush1.msra.mxu0 0.0
    %1218 = vmatprep.subr.mxu0 0.0
    %1219 = vmatpush1.msra.mxu0 0.0
    %1220 = vmatprep.subr.mxu0 0.0
    %1221 = vmatpush1.msra.mxu0 0.0
    %1222 = vmatprep.subr.mxu0 0.0
    %1223 = vmatpush1.msra.mxu0 0.0
    %1224 = vmatprep.subr.mxu0 0.0
    %1225 = vmatpush1.msra.mxu0 0.0
    %1226 = vmatprep.subr.mxu0 0.0
    %1227 = vmatpush1.msra.mxu0 0.0
    %1228 = vmatprep.subr.mxu0 0.0
    %1229 = vmatpush1.msra.mxu0 0.0
    %1230 = vmatprep.subr.mxu0 0.0
    %1231 = vmatpush1.msra.mxu0 0.0
    %1232 = vmatprep.subr.mxu0 0.0
    %1233 = vmatpush1.msra.mxu0 0.0
    %1234 = vmatprep.subr.mxu0 0.0
    %1235 = vmatpush1.msra.mxu0 0.0
    %1236 = vmatprep.mubr.f32.mxu0 0.0
    %1237 = vmatmul.mubr.f32.gmra.mrb[0].mxu0 %v1167
    %v1238 = vpop.f32.mrb[0].mxu0
    %v1239 = vadd.f32 0.0, %v1238
    %v1240 = vpop.f32.mrb[0].mxu0
    %1241 = vmatprep.mubr.f32.mxu0 0.0
    %1242 = vmatmul.mubr.f32.gmra.mrb[0].mxu0 %v1170
    %v1243 = vpop.f32.mrb[0].mxu0
    %v1244 = vadd.f32 0.0, %v1243
    %v1245 = vpop.f32.mrb[0].mxu0
    %1246 = vdwg.mxu0
    %v1249 = vrot.slane %v1244, 7
    %vm1250 = vcmask 1041409
    %v1251 = vsel %vm1250, %v1249, %v1239
    %vm1253 = vcmask 58368
    %1254 = vst.msk [vmem:[#allocation3] sm:$0x3] %vm1253, %v1251
    %vm1255 = vcmask 1042434
    %v1256 = vsel %vm1255, %v1249, %v1239
    %1257 = vrot.lane.b32.xlu0 %v1256, 8
    %v1258 = vpop.permute.xlu0 %1257
    %vm1260 = vcmask 124993
    %1261 = vst.msk [vmem:[#allocation3 - $0x1] sm:$0x6] %vm1260, %v1258
    %vm1262 = vcmask 1043459
    %v1263 = vsel %vm1262, %v1249, %v1239
    %1264 = vrot.lane.b32.xlu0 %v1263, 16
    %v1265 = vpop.permute.xlu0 %1264
    %vm1267 = vcmask 191618
    %1268 = vst.msk [vmem:[#allocation3 - $0x2] sm:$0xc] %vm1267, %v1265
    %vm1269 = vcmask 1044484
    %v1270 = vsel %vm1269, %v1249, %v1239
    %1271 = vrot.lane.b32.xlu0 %v1270, 24
    %v1272 = vpop.permute.xlu0 %1271
    %vm1274 = vcmask 258243
    %1275 = vst.msk [vmem:[#allocation3 - $0x3] sm:$0x18] %vm1274, %v1272
    %vm1276 = vcmask 1045509
    %v1277 = vsel %vm1276, %v1249, %v1239
    %1278 = vrot.lane.b32.xlu0 %v1277, 32
    %v1279 = vpop.permute.xlu0 %1278
    %vm1281 = vcmask 324868
    %1282 = vst.msk [vmem:[#allocation3 - $0x4] sm:$0x30] %vm1281, %v1279
    %vm1283 = vcmask 1046534
    %v1284 = vsel %vm1283, %v1249, %v1239
    %1285 = vrot.lane.b32.xlu0 %v1284, 40
    %v1286 = vpop.permute.xlu0 %1285
    %vm1288 = vcmask 391493
    %1289 = vst.msk [vmem:[#allocation3 - $0x5] sm:$0x60] %vm1288, %v1286
    %vm1290 = vcmask 1047559
    %v1291 = vsel %vm1290, %v1249, %v1239
    %1292 = vrot.lane.b32.xlu0 %v1291, 48
    %v1293 = vpop.permute.xlu0 %1292
    %vm1295 = vcmask 458118
    %1296 = vst.msk [vmem:[#allocation3 - $0x6] sm:$0xc0] %vm1295, %v1293
    %1297 = vrot.lane.b32.xlu0 %v1239, 56
    %v1298 = vpop.permute.xlu0 %1297
    %1299 = vrot.lane.b32.xlu0 %v1249, 56
    %v1300 = vpop.permute.xlu0 %1299
    %vm1303 = vcmask 523719
    %1304 = vst.msk [vmem:[#allocation3 - $0x7] sm:$0x80] %vm1303, %v1298
    %vm1305 = vcmask 516544
    %1306 = vst.msk [vmem:[#allocation3 + $0x1] sm:$0x1] %vm1305, %v1300
    %v1307 = vld [vmem:[#allocation3] sm:$0x3]
    %v1308 = vld [vmem:[%s10] sm:$0xff]
    %v1309 = vld [vmem:[%s10 + $0x8] sm:$0xff]
    %v1310 = vld [vmem:[%s10 + $0x10] sm:$0xff]
    %v1311 = vld [vmem:[%s10 + $0x18] sm:$0xff]
    %v1312 = vld [vmem:[%s10 + $0x20] sm:$0xff]
    %v1313 = vld [vmem:[%s10 + $0x28] sm:$0xff]
    %v1314 = vld [vmem:[%s10 + $0x30] sm:$0xff]
    %v1315 = vld [vmem:[%s10 + $0x38] sm:$0xff]
    %v1316 = vld [vmem:[%s11] sm:$0x1]
    %v1318 = vlaneseq
    %v1319 = vshrl.u32 %v1318, 7
    %v1320 = vsub.s32 0, %v1319
    %v1321 = vrot.slane %v1316, %v1320
    %vm1323 = vcmask 523264
    %v1325 = vsel %vm1323, %v1307, 0
    %1327 = vmatprep.subr.mxu0 0.0
    %1328 = vmatpush1.msra.mxu0 %v1308
    %1329 = vmatprep.subr.mxu0 0.0
    %1330 = vmatpush1.msra.mxu0 %v1309
    %1331 = vmatprep.subr.mxu0 0.0
    %1332 = vmatpush1.msra.mxu0 %v1310
    %1333 = vmatprep.subr.mxu0 0.0
    %1334 = vmatpush1.msra.mxu0 %v1311
    %1335 = vmatprep.subr.mxu0 0.0
    %1336 = vmatpush1.msra.mxu0 %v1312
    %1337 = vmatprep.subr.mxu0 0.0
    %1338 = vmatpush1.msra.mxu0 %v1313
    %1339 = vmatprep.subr.mxu0 0.0
    %1340 = vmatpush1.msra.mxu0 %v1314
    %1341 = vmatprep.subr.mxu0 0.0
    %1342 = vmatpush1.msra.mxu0 %v1315
    %1343 = vmatprep.subr.mxu0 0.0
    %1344 = vmatpush1.msra.mxu0 0.0
    %1345 = vmatprep.subr.mxu0 0.0
    %1346 = vmatpush1.msra.mxu0 0.0
    %1347 = vmatprep.subr.mxu0 0.0
    %1348 = vmatpush1.msra.mxu0 0.0
    %1349 = vmatprep.subr.mxu0 0.0
    %1350 = vmatpush1.msra.mxu0 0.0
    %1351 = vmatprep.subr.mxu0 0.0
    %1352 = vmatpush1.msra.mxu0 0.0
    %1353 = vmatprep.subr.mxu0 0.0
    %1354 = vmatpush1.msra.mxu0 0.0
    %1355 = vmatprep.subr.mxu0 0.0
    %1356 = vmatpush1.msra.mxu0 0.0
    %1357 = vmatprep.subr.mxu0 0.0
    %1358 = vmatpush1.msra.mxu0 0.0
    %1359 = vmatprep.subr.mxu0 0.0
    %1360 = vmatpush1.msra.mxu0 0.0
    %1361 = vmatprep.subr.mxu0 0.0
    %1362 = vmatpush1.msra.mxu0 0.0
    %1363 = vmatprep.subr.mxu0 0.0
    %1364 = vmatpush1.msra.mxu0 0.0
    %1365 = vmatprep.subr.mxu0 0.0
    %1366 = vmatpush1.msra.mxu0 0.0
    %1367 = vmatprep.subr.mxu0 0.0
    %1368 = vmatpush1.msra.mxu0 0.0
    %1369 = vmatprep.subr.mxu0 0.0
    %1370 = vmatpush1.msra.mxu0 0.0
    %1371 = vmatprep.subr.mxu0 0.0
    %1372 = vmatpush1.msra.mxu0 0.0
    %1373 = vmatprep.subr.mxu0 0.0
    %1374 = vmatpush1.msra.mxu0 0.0
    %1375 = vmatprep.subr.mxu0 0.0
    %1376 = vmatpush1.msra.mxu0 0.0
    %1377 = vmatprep.subr.mxu0 0.0
    %1378 = vmatpush1.msra.mxu0 0.0
    %1379 = vmatprep.subr.mxu0 0.0
    %1380 = vmatpush1.msra.mxu0 0.0
    %1381 = vmatprep.subr.mxu0 0.0
    %1382 = vmatpush1.msra.mxu0 0.0
    %1383 = vmatprep.subr.mxu0 0.0
    %1384 = vmatpush1.msra.mxu0 0.0
    %1385 = vmatprep.subr.mxu0 0.0
    %1386 = vmatpush1.msra.mxu0 0.0
    %1387 = vmatprep.subr.mxu0 0.0
    %1388 = vmatpush1.msra.mxu0 0.0
    %1389 = vmatprep.subr.mxu0 0.0
    %1390 = vmatpush1.msra.mxu0 0.0
    %1391 = vmatprep.mubr.f32.mxu0 0.0
    %1392 = vmatmul.mubr.f32.gmra.mrb[0].mxu0 %v1325
    %v1393 = vpop.f32.mrb[0].mxu0
    %v1394 = vadd.f32 %v1321, %v1393
    %v1395 = vpop.f32.mrb[0].mxu0
    %1396 = vdwg.mxu0
    %vm1397 = vcmask 123904
    %1398 = vst.msk [vmem:[#allocation4] sm:$0x3] %vm1397, %v1394
    // Predicated region
    $region50: #{tpu_custom_call.1} parent=1 // pred_check
      _
    $region51: #{tpu_custom_call.1} parent=1 // pred_check_branch
      %1400 = sbr.rel (0) target = $region53
    $region52: #{tpu_custom_call.1} parent=1 // pred_region
      %s1402 = ssub.s32 32, 32
      %1403 = vsyncadd [#allocation5], %s1402
      %s1405 = sshll.u32 [#allocation4], 4
      %s1406 = int_to_ptr.vmem [resolvable:$true] %s1405
      %1408 = dma.vmem_to_hbm [thread:$0]  %s1406, 32, %s12, [#allocation5]
    $region53: #{tpu_custom_call.1} parent=1 // pred_fallthru
      _
    // Predicated region
    $region54: #{tpu_custom_call.1} parent=1 // pred_check
      _
    $region55: #{tpu_custom_call.1} parent=1 // pred_check_branch
      %1410 = sbr.rel (0) target = $region57
    $region56: #{tpu_custom_call.1} parent=1 // pred_region
      %1411 = dma.done [#allocation5], 32
    $region57: #{tpu_custom_call.1} parent=1 // pred_fallthru
      _
    %1412 = vsyncpa [#allocation5], 1

</llo_original>
